<compile_context>
chip_gen: v6e
topology: v6e:2x2x1
jax: 0.10.0
libtpu: 0.0.40
codegen_flags: <defaults>
</compile_context>

<pallas_src>
from functools import partial

import jax
import jax.numpy as jnp
import numpy as np
from jax import lax
from jax.experimental import pallas as pl
from jax.experimental.pallas import tpu as pltpu


def _encoder_kernel(data_ref, w_ih_ref, w_hh_ref, b_ref, w_out_ref, b_out_ref,
                    pred_ref):
    """Whole forward pass in one kernel invocation (everything resident in VMEM).

    Shapes (float32):
      data_ref : (T, B, 1)   time-major input sequence, batch padded to 8
      w_ih_ref : (1, 4H)     W_ih^T (input_size == 1)
      w_hh_ref : (H, 4H)     W_hh^T, true K=32 shape (no zero padding)
      b_ref    : (1, 4H)     b_ih + b_hh (fused once at pack time)
      w_out_ref: (1, H)      hidden2temp weight row
      b_out_ref: (1, 1)      hidden2temp bias
      pred_ref : (B, P)      predictions (single store at the end)

    Gate lane layout follows PyTorch: [i | f | g | o] along the 4H axis.
    """
    T, B, _ = data_ref.shape
    H, G = w_hh_ref.shape            # hidden_dim, 4 * hidden_dim
    P = pred_ref.shape[1]

    w_ih = w_ih_ref[...]             # (1, 4H)
    w_hh = w_hh_ref[...]             # (H, 4H)  -> 4 vregs at H=32
    b = b_ref[...]                   # (1, 4H)
    w_out = w_out_ref[...]           # (1, H)
    b_out = b_out_ref[...]           # (1, 1)

    # Hoisted broadcasts (JAX does not CSE broadcast_in_dim inside loops).
    b_bcast = jnp.broadcast_to(b, (B, G))
    b_out_bcast = jnp.broadcast_to(b_out, (B, 1))
    w_out_bcast = jnp.broadcast_to(w_out, (B, H))

    def cell(gx, h, c):
        """One LSTM step; `gx` already holds x @ W_ih^T + (b_ih + b_hh)."""
        # K=32, N=128 MXU matmul: only the true weight rows are staged per step.
        gates = jnp.dot(h, w_hh, preferred_element_type=jnp.float32) + gx   # (B, 4H)
        # Full-width activations: 2 EUP pushes instead of 4 sliced ones; gate
        # extraction is plain static lane slicing (compiler inserts the needed
        # lane shifts on the otherwise-idle XLU).
        sig = jax.nn.sigmoid(gates)          # lanes: [ si | sf | sg | so ]
        tnh = jnp.tanh(gates)                # lanes: [ ti | tf | tg | to ]
        i_g = sig[:, 0:H]
        f_g = sig[:, H:2 * H]
        o_g = sig[:, 3 * H:4 * H]
        g_g = tnh[:, 2 * H:3 * H]
        c_new = f_g * c + i_g * g_g          # (B, H)
        h_new = o_g * jnp.tanh(c_new)        # (B, H)
        return h_new, c_new

    h0 = jnp.zeros((B, H), jnp.float32)
    c0 = jnp.zeros((B, H), jnp.float32)

    # First decoder call: LSTM over the whole input sequence from zero state
    # (iteration i == 0 of the PyTorch loop).  T is small and static -> fully
    # unrolled so the scheduler can overlap adjacent steps.  The input projection
    # (input_size == 1 -> VPU broadcast multiply) is computed in registers per
    # step; no VMEM scratch round-trip.
    def data_body(t, hc):
        h, c = hc
        gx = data_ref[t] * w_ih + b_bcast    # (B,1)*(1,4H) + (B,4H) -> (B,4H)
        return cell(gx, h, c)

    h, c = lax.fori_loop(0, T, data_body, (h0, c0), unroll=True)

    # Autoregressive prediction loop: P is small & static -> straight-line code;
    # the final LSTM cell (whose output PyTorch never uses) is peeled off.
    col = lax.broadcasted_iota(jnp.int32, (B, P), 1)
    preds = jnp.zeros((B, P), jnp.float32)
    for i in range(P):
        # hidden2temp with output_size == 1: lane reduction (XLU) instead of an
        # N=1 MXU matmul -> keeps MXU push/pop latency off the feedback chain.
        y = jnp.sum(h * w_out_bcast, axis=-1, keepdims=True) + b_out_bcast   # (B, 1)
        preds = jnp.where(col == i, y, preds)        # accumulate in registers
        if i + 1 < P:
            # Feed the prediction back as the next single-step LSTM input:
            # x @ W_ih^T with input_size == 1 is a broadcast multiply (VPU).
            gx = y * w_ih + b_bcast
            h, c = cell(gx, h, c)

    # Single lane-dense store instead of P masked (B, 1) stores.
    pred_ref[...] = preds


def pack_params(params):
    """One-time parameter packing (hoisted out of the per-call path)."""
    w_ih, w_hh, b_ih, b_hh, w_out, b_out = params
    H = w_hh.shape[1]
    G = 4 * H
    w_ih_row = jnp.asarray(w_ih, jnp.float32).reshape(G, 1).T           # (1, 4H)
    w_hh_t = jnp.asarray(w_hh, jnp.float32).T                           # (H, 4H)
    b = (jnp.asarray(b_ih, jnp.float32)
         + jnp.asarray(b_hh, jnp.float32)).reshape(1, G)                # (1, 4H)
    w_out_row = jnp.asarray(w_out, jnp.float32).reshape(1, H)           # (1, H)
    b_out2 = jnp.asarray(b_out, jnp.float32).reshape(1, 1)              # (1, 1)
    return (w_ih_row, w_hh_t, b, w_out_row, b_out2)


@partial(jax.jit, static_argnums=(2,))
def encoder_forward(data, packed_params, prediction_time_steps):
    """data: (B, T, input_size) batch-first (PyTorch convention).

    `packed_params` comes from `pack_params` (built once, not per call).
    Returns (B, prediction_time_steps, 1), matching Encoder.forward.
    """
    w_ih_row, w_hh_t, b, w_out_row, b_out2 = packed_params
    B, T, in_size = data.shape
    H, G = w_hh_t.shape
    out_size = w_out_row.shape[0]
    # The reference module feeds its scalar prediction back in as the next LSTM
    # input, which only typechecks for input_size == output_size == 1.
    assert in_size == 1 and out_size == 1, "Encoder requires input_size == output_size == 1"
    P = int(prediction_time_steps)

    # Pad batch to a full f32 sublane group (8 rows).  For throughput, pack
    # multiple real sequences into the batch instead of carrying padding.
    B_pad = max(8, ((B + 7) // 8) * 8)
    data_tm = jnp.transpose(data, (1, 0, 2)).astype(jnp.float32)        # (T, B, 1)
    data_tm = jnp.pad(data_tm, ((0, 0), (0, B_pad - B), (0, 0)))        # (T, B_pad, 1)

    vmem = pl.BlockSpec(memory_space=pltpu.MemorySpace.VMEM)
    # Single-program, everything-resident kernel: working set is a few tens of KB,
    # far under VMEM on v5e/v6e (128 MiB) and v7x (64 MiB).  A gridded/pipelined T
    # axis or a parallel batch grid (v7x's 2 TensorCores) only pays off once the
    # batch is scaled well beyond this demo size.
    pred = pl.pallas_call(
        _encoder_kernel,
        out_shape=jax.ShapeDtypeStruct((B_pad, P), jnp.float32),
        in_specs=[vmem] * 6,
        out_specs=vmem,
    )(data_tm, w_ih_row, w_hh_t, b, w_out_row, b_out2)

    return pred[:B].reshape(B, P, 1)


def init_params(key, hidden_dim, input_size, output_size):
    """Deterministic parameter init with PyTorch-style uniform(-1/sqrt(H), 1/sqrt(H))."""
    k = 1.0 / jnp.sqrt(jnp.float32(hidden_dim))
    ks = jax.random.split(key, 6)
    w_ih = jax.random.uniform(ks[0], (4 * hidden_dim, input_size), jnp.float32, -k, k)
    w_hh = jax.random.uniform(ks[1], (4 * hidden_dim, hidden_dim), jnp.float32, -k, k)
    b_ih = jax.random.uniform(ks[2], (4 * hidden_dim,), jnp.float32, -k, k)
    b_hh = jax.random.uniform(ks[3], (4 * hidden_dim,), jnp.float32, -k, k)
    w_out = jax.random.uniform(ks[4], (output_size, hidden_dim), jnp.float32, -k, k)
    b_out = jax.random.uniform(ks[5], (output_size,), jnp.float32, -k, k)
    return (w_ih, w_hh, b_ih, b_hh, w_out, b_out)


def encoder_reference_np(data, params, prediction_time_steps):
    """Pure NumPy float64 reference of Encoder.forward (ground truth)."""
    w_ih, w_hh, b_ih, b_hh, w_out, b_out = [np.asarray(p, np.float64) for p in params]
    data = np.asarray(data, np.float64)
    B = data.shape[0]
    H = w_hh.shape[1]

    def sigmoid(x):
        return 1.0 / (1.0 + np.exp(-x))

    def cell(x, h, c):
        gates = x @ w_ih.T + b_ih + h @ w_hh.T + b_hh
        i = sigmoid(gates[:, 0:H])
        f = sigmoid(gates[:, H:2 * H])
        g = np.tanh(gates[:, 2 * H:3 * H])
        o = sigmoid(gates[:, 3 * H:4 * H])
        c = f * c + i * g
        h = o * np.tanh(c)
        return h, c

    h = np.zeros((B, H))
    c = np.zeros((B, H))
    preds = np.zeros((B, prediction_time_steps, 1))
    x_seq = data
    for i in range(prediction_time_steps):
        for t in range(x_seq.shape[1]):
            h, c = cell(x_seq[:, t, :], h, c)
        y = h @ w_out.T + b_out
        preds[:, i, :] = y
        x_seq = y[:, None, :]
    return preds


if __name__ == "__main__":
    hidden_dim = 32
    input_size = 1      # module feeds its scalar prediction back in -> input_size == output_size == 1
    output_size = 1
    batch = 2
    seq_len = 8
    prediction_time_steps = 5

    key = jax.random.PRNGKey(0)
    k_data, k_params = jax.random.split(key)
    data = jax.random.normal(k_data, (batch, seq_len, input_size), jnp.float32)
    params = init_params(k_params, hidden_dim, input_size, output_size)

    packed = pack_params(params)    # one-time packing, not on the per-call path

    preds = encoder_forward(data, packed, prediction_time_steps)
    preds = jax.block_until_ready(preds)

    assert preds.shape == (batch, prediction_time_steps, output_size)
    preds_np = np.asarray(preds)
    assert np.all(np.isfinite(preds_np))

    ref = encoder_reference_np(np.asarray(data), [np.asarray(p) for p in params],
                               prediction_time_steps)
    assert np.allclose(preds_np, ref, rtol=1e-3, atol=1e-3), (
        "max abs err vs reference: %g" % np.max(np.abs(preds_np - ref)))

    print("KERNEL_OK")
</pallas_src>

<mosaic_0001>
module attributes {stable_mosaic.version = 11 : i64} {
  func.func @_encoder_kernel(%arg0: memref<8x8x1xf32, #tpu.memory_space<vmem>>, %arg1: memref<1x128xf32, #tpu.memory_space<vmem>>, %arg2: memref<32x128xf32, #tpu.memory_space<vmem>>, %arg3: memref<1x128xf32, #tpu.memory_space<vmem>>, %arg4: memref<1x32xf32, #tpu.memory_space<vmem>>, %arg5: memref<1x1xf32, #tpu.memory_space<vmem>>, %arg6: memref<8x5xf32, #tpu.memory_space<vmem>>) attributes {dimension_semantics = [], scalar_prefetch = 0 : i64, scratch_operands = 0 : i64, tpu.core_type = #tpu.core_type<tc>} {
    %c0 = arith.constant 0 : index
    %c0_0 = arith.constant 0 : index
    %0 = vector.load %arg1[%c0, %c0_0] : memref<1x128xf32, #tpu.memory_space<vmem>>, vector<1x128xf32>
    %c0_1 = arith.constant 0 : index
    %c0_2 = arith.constant 0 : index
    %1 = vector.load %arg2[%c0_1, %c0_2] : memref<32x128xf32, #tpu.memory_space<vmem>>, vector<32x128xf32>
    %c0_3 = arith.constant 0 : index
    %c0_4 = arith.constant 0 : index
    %2 = vector.load %arg3[%c0_3, %c0_4] : memref<1x128xf32, #tpu.memory_space<vmem>>, vector<1x128xf32>
    %c0_5 = arith.constant 0 : index
    %c0_6 = arith.constant 0 : index
    %3 = vector.load %arg4[%c0_5, %c0_6] : memref<1x32xf32, #tpu.memory_space<vmem>>, vector<1x32xf32>
    %c0_7 = arith.constant 0 : index
    %c0_8 = arith.constant 0 : index
    %4 = vector.load %arg5[%c0_7, %c0_8] : memref<1x1xf32, #tpu.memory_space<vmem>>, vector<1x1xf32>
    %5 = vector.shape_cast %2 : vector<1x128xf32> to vector<1x128xf32>
    %6 = vector.broadcast %5 : vector<1x128xf32> to vector<8x128xf32>
    %7 = vector.shape_cast %4 : vector<1x1xf32> to vector<1x1xf32>
    %8 = vector.broadcast %7 : vector<1x1xf32> to vector<8x1xf32>
    %9 = vector.shape_cast %3 : vector<1x32xf32> to vector<1x32xf32>
    %10 = vector.broadcast %9 : vector<1x32xf32> to vector<8x32xf32>
    %cst = arith.constant 0.000000e+00 : f32
    %11 = vector.broadcast %cst : f32 to vector<8x32xf32>
    %cst_9 = arith.constant 0.000000e+00 : f32
    %12 = vector.broadcast %cst_9 : f32 to vector<8x32xf32>
    %c0_i32 = arith.constant 0 : i32
    %13 = arith.index_cast %c0_i32 : i32 to index
    %c0_10 = arith.constant 0 : index
    %c0_11 = arith.constant 0 : index
    %14 = vector.load %arg0[%13, %c0_10, %c0_11] : memref<8x8x1xf32, #tpu.memory_space<vmem>>, vector<1x8x1xf32>
    %15 = vector.shape_cast %14 : vector<1x8x1xf32> to vector<8x1xf32>
    %16 = vector.broadcast %15 : vector<8x1xf32> to vector<8x128xf32>
    %17 = vector.broadcast %0 : vector<1x128xf32> to vector<8x128xf32>
    %18 = arith.mulf %16, %17 : vector<8x128xf32>
    %19 = arith.addf %18, %6 : vector<8x128xf32>
    %cst_12 = arith.constant dense<0.000000e+00> : vector<8x128xf32>
    %20 = tpu.matmul %11, %1, %cst_12 {dimension_numbers = #tpu.dot_dimension_numbers<[1], [0], [0], [1], [0, 0, 1, 1], [], []>} : vector<8x32xf32>, vector<32x128xf32>, vector<8x128xf32> -> vector<8x128xf32>
    %21 = arith.addf %20, %19 : vector<8x128xf32>
    %22 = arith.negf %21 : vector<8x128xf32>
    %23 = math.exp %22 : vector<8x128xf32>
    %cst_13 = arith.constant 1.000000e+00 : f32
    %24 = vector.broadcast %cst_13 : f32 to vector<8x128xf32>
    %25 = arith.addf %24, %23 : vector<8x128xf32>
    %26 = arith.divf %24, %25 : vector<8x128xf32>
    %27 = math.tanh %21 : vector<8x128xf32>
    %28 = vector.extract_strided_slice %26 {offsets = [0, 0], sizes = [8, 32], strides = [1, 1]} : vector<8x128xf32> to vector<8x32xf32>
    %29 = vector.extract_strided_slice %26 {offsets = [0, 32], sizes = [8, 32], strides = [1, 1]} : vector<8x128xf32> to vector<8x32xf32>
    %30 = vector.extract_strided_slice %26 {offsets = [0, 96], sizes = [8, 32], strides = [1, 1]} : vector<8x128xf32> to vector<8x32xf32>
    %31 = vector.extract_strided_slice %27 {offsets = [0, 64], sizes = [8, 32], strides = [1, 1]} : vector<8x128xf32> to vector<8x32xf32>
    %32 = arith.mulf %29, %12 : vector<8x32xf32>
    %33 = arith.mulf %28, %31 : vector<8x32xf32>
    %34 = arith.addf %32, %33 : vector<8x32xf32>
    %35 = math.tanh %34 : vector<8x32xf32>
    %36 = arith.mulf %30, %35 : vector<8x32xf32>
    %c1_i32 = arith.constant 1 : i32
    %37 = arith.index_cast %c1_i32 : i32 to index
    %c0_14 = arith.constant 0 : index
    %c0_15 = arith.constant 0 : index
    %38 = vector.load %arg0[%37, %c0_14, %c0_15] : memref<8x8x1xf32, #tpu.memory_space<vmem>>, vector<1x8x1xf32>
    %39 = vector.shape_cast %38 : vector<1x8x1xf32> to vector<8x1xf32>
    %40 = vector.broadcast %39 : vector<8x1xf32> to vector<8x128xf32>
    %41 = vector.broadcast %0 : vector<1x128xf32> to vector<8x128xf32>
    %42 = arith.mulf %40, %41 : vector<8x128xf32>
    %43 = arith.addf %42, %6 : vector<8x128xf32>
    %cst_16 = arith.constant dense<0.000000e+00> : vector<8x128xf32>
    %44 = tpu.matmul %36, %1, %cst_16 {dimension_numbers = #tpu.dot_dimension_numbers<[1], [0], [0], [1], [0, 0, 1, 1], [], []>} : vector<8x32xf32>, vector<32x128xf32>, vector<8x128xf32> -> vector<8x128xf32>
    %45 = arith.addf %44, %43 : vector<8x128xf32>
    %46 = arith.negf %45 : vector<8x128xf32>
    %47 = math.exp %46 : vector<8x128xf32>
    %cst_17 = arith.constant 1.000000e+00 : f32
    %48 = vector.broadcast %cst_17 : f32 to vector<8x128xf32>
    %49 = arith.addf %48, %47 : vector<8x128xf32>
    %50 = arith.divf %48, %49 : vector<8x128xf32>
    %51 = math.tanh %45 : vector<8x128xf32>
    %52 = vector.extract_strided_slice %50 {offsets = [0, 0], sizes = [8, 32], strides = [1, 1]} : vector<8x128xf32> to vector<8x32xf32>
    %53 = vector.extract_strided_slice %50 {offsets = [0, 32], sizes = [8, 32], strides = [1, 1]} : vector<8x128xf32> to vector<8x32xf32>
    %54 = vector.extract_strided_slice %50 {offsets = [0, 96], sizes = [8, 32], strides = [1, 1]} : vector<8x128xf32> to vector<8x32xf32>
    %55 = vector.extract_strided_slice %51 {offsets = [0, 64], sizes = [8, 32], strides = [1, 1]} : vector<8x128xf32> to vector<8x32xf32>
    %56 = arith.mulf %53, %34 : vector<8x32xf32>
    %57 = arith.mulf %52, %55 : vector<8x32xf32>
    %58 = arith.addf %56, %57 : vector<8x32xf32>
    %59 = math.tanh %58 : vector<8x32xf32>
    %60 = arith.mulf %54, %59 : vector<8x32xf32>
    %c2_i32 = arith.constant 2 : i32
    %61 = arith.index_cast %c2_i32 : i32 to index
    %c0_18 = arith.constant 0 : index
    %c0_19 = arith.constant 0 : index
    %62 = vector.load %arg0[%61, %c0_18, %c0_19] : memref<8x8x1xf32, #tpu.memory_space<vmem>>, vector<1x8x1xf32>
    %63 = vector.shape_cast %62 : vector<1x8x1xf32> to vector<8x1xf32>
    %64 = vector.broadcast %63 : vector<8x1xf32> to vector<8x128xf32>
    %65 = vector.broadcast %0 : vector<1x128xf32> to vector<8x128xf32>
    %66 = arith.mulf %64, %65 : vector<8x128xf32>
    %67 = arith.addf %66, %6 : vector<8x128xf32>
    %cst_20 = arith.constant dense<0.000000e+00> : vector<8x128xf32>
    %68 = tpu.matmul %60, %1, %cst_20 {dimension_numbers = #tpu.dot_dimension_numbers<[1], [0], [0], [1], [0, 0, 1, 1], [], []>} : vector<8x32xf32>, vector<32x128xf32>, vector<8x128xf32> -> vector<8x128xf32>
    %69 = arith.addf %68, %67 : vector<8x128xf32>
    %70 = arith.negf %69 : vector<8x128xf32>
    %71 = math.exp %70 : vector<8x128xf32>
    %cst_21 = arith.constant 1.000000e+00 : f32
    %72 = vector.broadcast %cst_21 : f32 to vector<8x128xf32>
    %73 = arith.addf %72, %71 : vector<8x128xf32>
    %74 = arith.divf %72, %73 : vector<8x128xf32>
    %75 = math.tanh %69 : vector<8x128xf32>
    %76 = vector.extract_strided_slice %74 {offsets = [0, 0], sizes = [8, 32], strides = [1, 1]} : vector<8x128xf32> to vector<8x32xf32>
    %77 = vector.extract_strided_slice %74 {offsets = [0, 32], sizes = [8, 32], strides = [1, 1]} : vector<8x128xf32> to vector<8x32xf32>
    %78 = vector.extract_strided_slice %74 {offsets = [0, 96], sizes = [8, 32], strides = [1, 1]} : vector<8x128xf32> to vector<8x32xf32>
    %79 = vector.extract_strided_slice %75 {offsets = [0, 64], sizes = [8, 32], strides = [1, 1]} : vector<8x128xf32> to vector<8x32xf32>
    %80 = arith.mulf %77, %58 : vector<8x32xf32>
    %81 = arith.mulf %76, %79 : vector<8x32xf32>
    %82 = arith.addf %80, %81 : vector<8x32xf32>
    %83 = math.tanh %82 : vector<8x32xf32>
    %84 = arith.mulf %78, %83 : vector<8x32xf32>
    %c3_i32 = arith.constant 3 : i32
    %85 = arith.index_cast %c3_i32 : i32 to index
    %c0_22 = arith.constant 0 : index
    %c0_23 = arith.constant 0 : index
    %86 = vector.load %arg0[%85, %c0_22, %c0_23] : memref<8x8x1xf32, #tpu.memory_space<vmem>>, vector<1x8x1xf32>
    %87 = vector.shape_cast %86 : vector<1x8x1xf32> to vector<8x1xf32>
    %88 = vector.broadcast %87 : vector<8x1xf32> to vector<8x128xf32>
    %89 = vector.broadcast %0 : vector<1x128xf32> to vector<8x128xf32>
    %90 = arith.mulf %88, %89 : vector<8x128xf32>
    %91 = arith.addf %90, %6 : vector<8x128xf32>
    %cst_24 = arith.constant dense<0.000000e+00> : vector<8x128xf32>
    %92 = tpu.matmul %84, %1, %cst_24 {dimension_numbers = #tpu.dot_dimension_numbers<[1], [0], [0], [1], [0, 0, 1, 1], [], []>} : vector<8x32xf32>, vector<32x128xf32>, vector<8x128xf32> -> vector<8x128xf32>
    %93 = arith.addf %92, %91 : vector<8x128xf32>
    %94 = arith.negf %93 : vector<8x128xf32>
    %95 = math.exp %94 : vector<8x128xf32>
    %cst_25 = arith.constant 1.000000e+00 : f32
    %96 = vector.broadcast %cst_25 : f32 to vector<8x128xf32>
    %97 = arith.addf %96, %95 : vector<8x128xf32>
    %98 = arith.divf %96, %97 : vector<8x128xf32>
    %99 = math.tanh %93 : vector<8x128xf32>
    %100 = vector.extract_strided_slice %98 {offsets = [0, 0], sizes = [8, 32], strides = [1, 1]} : vector<8x128xf32> to vector<8x32xf32>
    %101 = vector.extract_strided_slice %98 {offsets = [0, 32], sizes = [8, 32], strides = [1, 1]} : vector<8x128xf32> to vector<8x32xf32>
    %102 = vector.extract_strided_slice %98 {offsets = [0, 96], sizes = [8, 32], strides = [1, 1]} : vector<8x128xf32> to vector<8x32xf32>
    %103 = vector.extract_strided_slice %99 {offsets = [0, 64], sizes = [8, 32], strides = [1, 1]} : vector<8x128xf32> to vector<8x32xf32>
    %104 = arith.mulf %101, %82 : vector<8x32xf32>
    %105 = arith.mulf %100, %103 : vector<8x32xf32>
    %106 = arith.addf %104, %105 : vector<8x32xf32>
    %107 = math.tanh %106 : vector<8x32xf32>
    %108 = arith.mulf %102, %107 : vector<8x32xf32>
    %c4_i32 = arith.constant 4 : i32
    %109 = arith.index_cast %c4_i32 : i32 to index
    %c0_26 = arith.constant 0 : index
    %c0_27 = arith.constant 0 : index
    %110 = vector.load %arg0[%109, %c0_26, %c0_27] : memref<8x8x1xf32, #tpu.memory_space<vmem>>, vector<1x8x1xf32>
    %111 = vector.shape_cast %110 : vector<1x8x1xf32> to vector<8x1xf32>
    %112 = vector.broadcast %111 : vector<8x1xf32> to vector<8x128xf32>
    %113 = vector.broadcast %0 : vector<1x128xf32> to vector<8x128xf32>
    %114 = arith.mulf %112, %113 : vector<8x128xf32>
    %115 = arith.addf %114, %6 : vector<8x128xf32>
    %cst_28 = arith.constant dense<0.000000e+00> : vector<8x128xf32>
    %116 = tpu.matmul %108, %1, %cst_28 {dimension_numbers = #tpu.dot_dimension_numbers<[1], [0], [0], [1], [0, 0, 1, 1], [], []>} : vector<8x32xf32>, vector<32x128xf32>, vector<8x128xf32> -> vector<8x128xf32>
    %117 = arith.addf %116, %115 : vector<8x128xf32>
    %118 = arith.negf %117 : vector<8x128xf32>
    %119 = math.exp %118 : vector<8x128xf32>
    %cst_29 = arith.constant 1.000000e+00 : f32
    %120 = vector.broadcast %cst_29 : f32 to vector<8x128xf32>
    %121 = arith.addf %120, %119 : vector<8x128xf32>
    %122 = arith.divf %120, %121 : vector<8x128xf32>
    %123 = math.tanh %117 : vector<8x128xf32>
    %124 = vector.extract_strided_slice %122 {offsets = [0, 0], sizes = [8, 32], strides = [1, 1]} : vector<8x128xf32> to vector<8x32xf32>
    %125 = vector.extract_strided_slice %122 {offsets = [0, 32], sizes = [8, 32], strides = [1, 1]} : vector<8x128xf32> to vector<8x32xf32>
    %126 = vector.extract_strided_slice %122 {offsets = [0, 96], sizes = [8, 32], strides = [1, 1]} : vector<8x128xf32> to vector<8x32xf32>
    %127 = vector.extract_strided_slice %123 {offsets = [0, 64], sizes = [8, 32], strides = [1, 1]} : vector<8x128xf32> to vector<8x32xf32>
    %128 = arith.mulf %125, %106 : vector<8x32xf32>
    %129 = arith.mulf %124, %127 : vector<8x32xf32>
    %130 = arith.addf %128, %129 : vector<8x32xf32>
    %131 = math.tanh %130 : vector<8x32xf32>
    %132 = arith.mulf %126, %131 : vector<8x32xf32>
    %c5_i32 = arith.constant 5 : i32
    %133 = arith.index_cast %c5_i32 : i32 to index
    %c0_30 = arith.constant 0 : index
    %c0_31 = arith.constant 0 : index
    %134 = vector.load %arg0[%133, %c0_30, %c0_31] : memref<8x8x1xf32, #tpu.memory_space<vmem>>, vector<1x8x1xf32>
    %135 = vector.shape_cast %134 : vector<1x8x1xf32> to vector<8x1xf32>
    %136 = vector.broadcast %135 : vector<8x1xf32> to vector<8x128xf32>
    %137 = vector.broadcast %0 : vector<1x128xf32> to vector<8x128xf32>
    %138 = arith.mulf %136, %137 : vector<8x128xf32>
    %139 = arith.addf %138, %6 : vector<8x128xf32>
    %cst_32 = arith.constant dense<0.000000e+00> : vector<8x128xf32>
    %140 = tpu.matmul %132, %1, %cst_32 {dimension_numbers = #tpu.dot_dimension_numbers<[1], [0], [0], [1], [0, 0, 1, 1], [], []>} : vector<8x32xf32>, vector<32x128xf32>, vector<8x128xf32> -> vector<8x128xf32>
    %141 = arith.addf %140, %139 : vector<8x128xf32>
    %142 = arith.negf %141 : vector<8x128xf32>
    %143 = math.exp %142 : vector<8x128xf32>
    %cst_33 = arith.constant 1.000000e+00 : f32
    %144 = vector.broadcast %cst_33 : f32 to vector<8x128xf32>
    %145 = arith.addf %144, %143 : vector<8x128xf32>
    %146 = arith.divf %144, %145 : vector<8x128xf32>
    %147 = math.tanh %141 : vector<8x128xf32>
    %148 = vector.extract_strided_slice %146 {offsets = [0, 0], sizes = [8, 32], strides = [1, 1]} : vector<8x128xf32> to vector<8x32xf32>
    %149 = vector.extract_strided_slice %146 {offsets = [0, 32], sizes = [8, 32], strides = [1, 1]} : vector<8x128xf32> to vector<8x32xf32>
    %150 = vector.extract_strided_slice %146 {offsets = [0, 96], sizes = [8, 32], strides = [1, 1]} : vector<8x128xf32> to vector<8x32xf32>
    %151 = vector.extract_strided_slice %147 {offsets = [0, 64], sizes = [8, 32], strides = [1, 1]} : vector<8x128xf32> to vector<8x32xf32>
    %152 = arith.mulf %149, %130 : vector<8x32xf32>
    %153 = arith.mulf %148, %151 : vector<8x32xf32>
    %154 = arith.addf %152, %153 : vector<8x32xf32>
    %155 = math.tanh %154 : vector<8x32xf32>
    %156 = arith.mulf %150, %155 : vector<8x32xf32>
    %c6_i32 = arith.constant 6 : i32
    %157 = arith.index_cast %c6_i32 : i32 to index
    %c0_34 = arith.constant 0 : index
    %c0_35 = arith.constant 0 : index
    %158 = vector.load %arg0[%157, %c0_34, %c0_35] : memref<8x8x1xf32, #tpu.memory_space<vmem>>, vector<1x8x1xf32>
    %159 = vector.shape_cast %158 : vector<1x8x1xf32> to vector<8x1xf32>
    %160 = vector.broadcast %159 : vector<8x1xf32> to vector<8x128xf32>
    %161 = vector.broadcast %0 : vector<1x128xf32> to vector<8x128xf32>
    %162 = arith.mulf %160, %161 : vector<8x128xf32>
    %163 = arith.addf %162, %6 : vector<8x128xf32>
    %cst_36 = arith.constant dense<0.000000e+00> : vector<8x128xf32>
    %164 = tpu.matmul %156, %1, %cst_36 {dimension_numbers = #tpu.dot_dimension_numbers<[1], [0], [0], [1], [0, 0, 1, 1], [], []>} : vector<8x32xf32>, vector<32x128xf32>, vector<8x128xf32> -> vector<8x128xf32>
    %165 = arith.addf %164, %163 : vector<8x128xf32>
    %166 = arith.negf %165 : vector<8x128xf32>
    %167 = math.exp %166 : vector<8x128xf32>
    %cst_37 = arith.constant 1.000000e+00 : f32
    %168 = vector.broadcast %cst_37 : f32 to vector<8x128xf32>
    %169 = arith.addf %168, %167 : vector<8x128xf32>
    %170 = arith.divf %168, %169 : vector<8x128xf32>
    %171 = math.tanh %165 : vector<8x128xf32>
    %172 = vector.extract_strided_slice %170 {offsets = [0, 0], sizes = [8, 32], strides = [1, 1]} : vector<8x128xf32> to vector<8x32xf32>
    %173 = vector.extract_strided_slice %170 {offsets = [0, 32], sizes = [8, 32], strides = [1, 1]} : vector<8x128xf32> to vector<8x32xf32>
    %174 = vector.extract_strided_slice %170 {offsets = [0, 96], sizes = [8, 32], strides = [1, 1]} : vector<8x128xf32> to vector<8x32xf32>
    %175 = vector.extract_strided_slice %171 {offsets = [0, 64], sizes = [8, 32], strides = [1, 1]} : vector<8x128xf32> to vector<8x32xf32>
    %176 = arith.mulf %173, %154 : vector<8x32xf32>
    %177 = arith.mulf %172, %175 : vector<8x32xf32>
    %178 = arith.addf %176, %177 : vector<8x32xf32>
    %179 = math.tanh %178 : vector<8x32xf32>
    %180 = arith.mulf %174, %179 : vector<8x32xf32>
    %c7_i32 = arith.constant 7 : i32
    %181 = arith.index_cast %c7_i32 : i32 to index
    %c0_38 = arith.constant 0 : index
    %c0_39 = arith.constant 0 : index
    %182 = vector.load %arg0[%181, %c0_38, %c0_39] : memref<8x8x1xf32, #tpu.memory_space<vmem>>, vector<1x8x1xf32>
    %183 = vector.shape_cast %182 : vector<1x8x1xf32> to vector<8x1xf32>
    %184 = vector.broadcast %183 : vector<8x1xf32> to vector<8x128xf32>
    %185 = vector.broadcast %0 : vector<1x128xf32> to vector<8x128xf32>
    %186 = arith.mulf %184, %185 : vector<8x128xf32>
    %187 = arith.addf %186, %6 : vector<8x128xf32>
    %cst_40 = arith.constant dense<0.000000e+00> : vector<8x128xf32>
    %188 = tpu.matmul %180, %1, %cst_40 {dimension_numbers = #tpu.dot_dimension_numbers<[1], [0], [0], [1], [0, 0, 1, 1], [], []>} : vector<8x32xf32>, vector<32x128xf32>, vector<8x128xf32> -> vector<8x128xf32>
    %189 = arith.addf %188, %187 : vector<8x128xf32>
    %190 = arith.negf %189 : vector<8x128xf32>
    %191 = math.exp %190 : vector<8x128xf32>
    %cst_41 = arith.constant 1.000000e+00 : f32
    %192 = vector.broadcast %cst_41 : f32 to vector<8x128xf32>
    %193 = arith.addf %192, %191 : vector<8x128xf32>
    %194 = arith.divf %192, %193 : vector<8x128xf32>
    %195 = math.tanh %189 : vector<8x128xf32>
    %196 = vector.extract_strided_slice %194 {offsets = [0, 0], sizes = [8, 32], strides = [1, 1]} : vector<8x128xf32> to vector<8x32xf32>
    %197 = vector.extract_strided_slice %194 {offsets = [0, 32], sizes = [8, 32], strides = [1, 1]} : vector<8x128xf32> to vector<8x32xf32>
    %198 = vector.extract_strided_slice %194 {offsets = [0, 96], sizes = [8, 32], strides = [1, 1]} : vector<8x128xf32> to vector<8x32xf32>
    %199 = vector.extract_strided_slice %195 {offsets = [0, 64], sizes = [8, 32], strides = [1, 1]} : vector<8x128xf32> to vector<8x32xf32>
    %200 = arith.mulf %197, %178 : vector<8x32xf32>
    %201 = arith.mulf %196, %199 : vector<8x32xf32>
    %202 = arith.addf %200, %201 : vector<8x32xf32>
    %203 = math.tanh %202 : vector<8x32xf32>
    %204 = arith.mulf %198, %203 : vector<8x32xf32>
    %c8_i32 = arith.constant 8 : i32
    %205 = tpu.iota {dimensions = array<i32: 1>} : vector<8x5xi32>
    %cst_42 = arith.constant 0.000000e+00 : f32
    %206 = vector.broadcast %cst_42 : f32 to vector<8x5xf32>
    %207 = arith.mulf %204, %10 : vector<8x32xf32>
    %cst_43 = arith.constant dense<0.000000e+00> : vector<8xf32>
    %208 = vector.multi_reduction <add>, %207, %cst_43 [1] : vector<8x32xf32> to vector<8xf32>
    %209 = vector.shape_cast %208 : vector<8xf32> to vector<8x1xf32>
    %210 = arith.addf %209, %8 : vector<8x1xf32>
    %c0_i32_44 = arith.constant 0 : i32
    %211 = vector.broadcast %c0_i32_44 : i32 to vector<8x5xi32>
    %212 = arith.cmpi eq, %205, %211 : vector<8x5xi32>
    %213 = vector.shape_cast %210 : vector<8x1xf32> to vector<8x1xf32>
    %214 = vector.broadcast %213 : vector<8x1xf32> to vector<8x5xf32>
    %215 = arith.select %212, %214, %206 : vector<8x5xi1>, vector<8x5xf32>
    %216 = vector.broadcast %210 : vector<8x1xf32> to vector<8x128xf32>
    %217 = vector.broadcast %0 : vector<1x128xf32> to vector<8x128xf32>
    %218 = arith.mulf %216, %217 : vector<8x128xf32>
    %219 = arith.addf %218, %6 : vector<8x128xf32>
    %cst_45 = arith.constant dense<0.000000e+00> : vector<8x128xf32>
    %220 = tpu.matmul %204, %1, %cst_45 {dimension_numbers = #tpu.dot_dimension_numbers<[1], [0], [0], [1], [0, 0, 1, 1], [], []>} : vector<8x32xf32>, vector<32x128xf32>, vector<8x128xf32> -> vector<8x128xf32>
    %221 = arith.addf %220, %219 : vector<8x128xf32>
    %222 = arith.negf %221 : vector<8x128xf32>
    %223 = math.exp %222 : vector<8x128xf32>
    %cst_46 = arith.constant 1.000000e+00 : f32
    %224 = vector.broadcast %cst_46 : f32 to vector<8x128xf32>
    %225 = arith.addf %224, %223 : vector<8x128xf32>
    %226 = arith.divf %224, %225 : vector<8x128xf32>
    %227 = math.tanh %221 : vector<8x128xf32>
    %228 = vector.extract_strided_slice %226 {offsets = [0, 0], sizes = [8, 32], strides = [1, 1]} : vector<8x128xf32> to vector<8x32xf32>
    %229 = vector.extract_strided_slice %226 {offsets = [0, 32], sizes = [8, 32], strides = [1, 1]} : vector<8x128xf32> to vector<8x32xf32>
    %230 = vector.extract_strided_slice %226 {offsets = [0, 96], sizes = [8, 32], strides = [1, 1]} : vector<8x128xf32> to vector<8x32xf32>
    %231 = vector.extract_strided_slice %227 {offsets = [0, 64], sizes = [8, 32], strides = [1, 1]} : vector<8x128xf32> to vector<8x32xf32>
    %232 = arith.mulf %229, %202 : vector<8x32xf32>
    %233 = arith.mulf %228, %231 : vector<8x32xf32>
    %234 = arith.addf %232, %233 : vector<8x32xf32>
    %235 = math.tanh %234 : vector<8x32xf32>
    %236 = arith.mulf %230, %235 : vector<8x32xf32>
    %237 = arith.mulf %236, %10 : vector<8x32xf32>
    %cst_47 = arith.constant dense<0.000000e+00> : vector<8xf32>
    %238 = vector.multi_reduction <add>, %237, %cst_47 [1] : vector<8x32xf32> to vector<8xf32>
    %239 = vector.shape_cast %238 : vector<8xf32> to vector<8x1xf32>
    %240 = arith.addf %239, %8 : vector<8x1xf32>
    %c1_i32_48 = arith.constant 1 : i32
    %241 = vector.broadcast %c1_i32_48 : i32 to vector<8x5xi32>
    %242 = arith.cmpi eq, %205, %241 : vector<8x5xi32>
    %243 = vector.shape_cast %240 : vector<8x1xf32> to vector<8x1xf32>
    %244 = vector.broadcast %243 : vector<8x1xf32> to vector<8x5xf32>
    %245 = arith.select %242, %244, %215 : vector<8x5xi1>, vector<8x5xf32>
    %246 = vector.broadcast %240 : vector<8x1xf32> to vector<8x128xf32>
    %247 = vector.broadcast %0 : vector<1x128xf32> to vector<8x128xf32>
    %248 = arith.mulf %246, %247 : vector<8x128xf32>
    %249 = arith.addf %248, %6 : vector<8x128xf32>
    %cst_49 = arith.constant dense<0.000000e+00> : vector<8x128xf32>
    %250 = tpu.matmul %236, %1, %cst_49 {dimension_numbers = #tpu.dot_dimension_numbers<[1], [0], [0], [1], [0, 0, 1, 1], [], []>} : vector<8x32xf32>, vector<32x128xf32>, vector<8x128xf32> -> vector<8x128xf32>
    %251 = arith.addf %250, %249 : vector<8x128xf32>
    %252 = arith.negf %251 : vector<8x128xf32>
    %253 = math.exp %252 : vector<8x128xf32>
    %cst_50 = arith.constant 1.000000e+00 : f32
    %254 = vector.broadcast %cst_50 : f32 to vector<8x128xf32>
    %255 = arith.addf %254, %253 : vector<8x128xf32>
    %256 = arith.divf %254, %255 : vector<8x128xf32>
    %257 = math.tanh %251 : vector<8x128xf32>
    %258 = vector.extract_strided_slice %256 {offsets = [0, 0], sizes = [8, 32], strides = [1, 1]} : vector<8x128xf32> to vector<8x32xf32>
    %259 = vector.extract_strided_slice %256 {offsets = [0, 32], sizes = [8, 32], strides = [1, 1]} : vector<8x128xf32> to vector<8x32xf32>
    %260 = vector.extract_strided_slice %256 {offsets = [0, 96], sizes = [8, 32], strides = [1, 1]} : vector<8x128xf32> to vector<8x32xf32>
    %261 = vector.extract_strided_slice %257 {offsets = [0, 64], sizes = [8, 32], strides = [1, 1]} : vector<8x128xf32> to vector<8x32xf32>
    %262 = arith.mulf %259, %234 : vector<8x32xf32>
    %263 = arith.mulf %258, %261 : vector<8x32xf32>
    %264 = arith.addf %262, %263 : vector<8x32xf32>
    %265 = math.tanh %264 : vector<8x32xf32>
    %266 = arith.mulf %260, %265 : vector<8x32xf32>
    %267 = arith.mulf %266, %10 : vector<8x32xf32>
    %cst_51 = arith.constant dense<0.000000e+00> : vector<8xf32>
    %268 = vector.multi_reduction <add>, %267, %cst_51 [1] : vector<8x32xf32> to vector<8xf32>
    %269 = vector.shape_cast %268 : vector<8xf32> to vector<8x1xf32>
    %270 = arith.addf %269, %8 : vector<8x1xf32>
    %c2_i32_52 = arith.constant 2 : i32
    %271 = vector.broadcast %c2_i32_52 : i32 to vector<8x5xi32>
    %272 = arith.cmpi eq, %205, %271 : vector<8x5xi32>
    %273 = vector.shape_cast %270 : vector<8x1xf32> to vector<8x1xf32>
    %274 = vector.broadcast %273 : vector<8x1xf32> to vector<8x5xf32>
    %275 = arith.select %272, %274, %245 : vector<8x5xi1>, vector<8x5xf32>
    %276 = vector.broadcast %270 : vector<8x1xf32> to vector<8x128xf32>
    %277 = vector.broadcast %0 : vector<1x128xf32> to vector<8x128xf32>
    %278 = arith.mulf %276, %277 : vector<8x128xf32>
    %279 = arith.addf %278, %6 : vector<8x128xf32>
    %cst_53 = arith.constant dense<0.000000e+00> : vector<8x128xf32>
    %280 = tpu.matmul %266, %1, %cst_53 {dimension_numbers = #tpu.dot_dimension_numbers<[1], [0], [0], [1], [0, 0, 1, 1], [], []>} : vector<8x32xf32>, vector<32x128xf32>, vector<8x128xf32> -> vector<8x128xf32>
    %281 = arith.addf %280, %279 : vector<8x128xf32>
    %282 = arith.negf %281 : vector<8x128xf32>
    %283 = math.exp %282 : vector<8x128xf32>
    %cst_54 = arith.constant 1.000000e+00 : f32
    %284 = vector.broadcast %cst_54 : f32 to vector<8x128xf32>
    %285 = arith.addf %284, %283 : vector<8x128xf32>
    %286 = arith.divf %284, %285 : vector<8x128xf32>
    %287 = math.tanh %281 : vector<8x128xf32>
    %288 = vector.extract_strided_slice %286 {offsets = [0, 0], sizes = [8, 32], strides = [1, 1]} : vector<8x128xf32> to vector<8x32xf32>
    %289 = vector.extract_strided_slice %286 {offsets = [0, 32], sizes = [8, 32], strides = [1, 1]} : vector<8x128xf32> to vector<8x32xf32>
    %290 = vector.extract_strided_slice %286 {offsets = [0, 96], sizes = [8, 32], strides = [1, 1]} : vector<8x128xf32> to vector<8x32xf32>
    %291 = vector.extract_strided_slice %287 {offsets = [0, 64], sizes = [8, 32], strides = [1, 1]} : vector<8x128xf32> to vector<8x32xf32>
    %292 = arith.mulf %289, %264 : vector<8x32xf32>
    %293 = arith.mulf %288, %291 : vector<8x32xf32>
    %294 = arith.addf %292, %293 : vector<8x32xf32>
    %295 = math.tanh %294 : vector<8x32xf32>
    %296 = arith.mulf %290, %295 : vector<8x32xf32>
    %297 = arith.mulf %296, %10 : vector<8x32xf32>
    %cst_55 = arith.constant dense<0.000000e+00> : vector<8xf32>
    %298 = vector.multi_reduction <add>, %297, %cst_55 [1] : vector<8x32xf32> to vector<8xf32>
    %299 = vector.shape_cast %298 : vector<8xf32> to vector<8x1xf32>
    %300 = arith.addf %299, %8 : vector<8x1xf32>
    %c3_i32_56 = arith.constant 3 : i32
    %301 = vector.broadcast %c3_i32_56 : i32 to vector<8x5xi32>
    %302 = arith.cmpi eq, %205, %301 : vector<8x5xi32>
    %303 = vector.shape_cast %300 : vector<8x1xf32> to vector<8x1xf32>
    %304 = vector.broadcast %303 : vector<8x1xf32> to vector<8x5xf32>
    %305 = arith.select %302, %304, %275 : vector<8x5xi1>, vector<8x5xf32>
    %306 = vector.broadcast %300 : vector<8x1xf32> to vector<8x128xf32>
    %307 = vector.broadcast %0 : vector<1x128xf32> to vector<8x128xf32>
    %308 = arith.mulf %306, %307 : vector<8x128xf32>
    %309 = arith.addf %308, %6 : vector<8x128xf32>
    %cst_57 = arith.constant dense<0.000000e+00> : vector<8x128xf32>
    %310 = tpu.matmul %296, %1, %cst_57 {dimension_numbers = #tpu.dot_dimension_numbers<[1], [0], [0], [1], [0, 0, 1, 1], [], []>} : vector<8x32xf32>, vector<32x128xf32>, vector<8x128xf32> -> vector<8x128xf32>
    %311 = arith.addf %310, %309 : vector<8x128xf32>
    %312 = arith.negf %311 : vector<8x128xf32>
    %313 = math.exp %312 : vector<8x128xf32>
    %cst_58 = arith.constant 1.000000e+00 : f32
    %314 = vector.broadcast %cst_58 : f32 to vector<8x128xf32>
    %315 = arith.addf %314, %313 : vector<8x128xf32>
    %316 = arith.divf %314, %315 : vector<8x128xf32>
    %317 = math.tanh %311 : vector<8x128xf32>
    %318 = vector.extract_strided_slice %316 {offsets = [0, 0], sizes = [8, 32], strides = [1, 1]} : vector<8x128xf32> to vector<8x32xf32>
    %319 = vector.extract_strided_slice %316 {offsets = [0, 32], sizes = [8, 32], strides = [1, 1]} : vector<8x128xf32> to vector<8x32xf32>
    %320 = vector.extract_strided_slice %316 {offsets = [0, 96], sizes = [8, 32], strides = [1, 1]} : vector<8x128xf32> to vector<8x32xf32>
    %321 = vector.extract_strided_slice %317 {offsets = [0, 64], sizes = [8, 32], strides = [1, 1]} : vector<8x128xf32> to vector<8x32xf32>
    %322 = arith.mulf %319, %294 : vector<8x32xf32>
    %323 = arith.mulf %318, %321 : vector<8x32xf32>
    %324 = arith.addf %322, %323 : vector<8x32xf32>
    %325 = math.tanh %324 : vector<8x32xf32>
    %326 = arith.mulf %320, %325 : vector<8x32xf32>
    %327 = arith.mulf %326, %10 : vector<8x32xf32>
    %cst_59 = arith.constant dense<0.000000e+00> : vector<8xf32>
    %328 = vector.multi_reduction <add>, %327, %cst_59 [1] : vector<8x32xf32> to vector<8xf32>
    %329 = vector.shape_cast %328 : vector<8xf32> to vector<8x1xf32>
    %330 = arith.addf %329, %8 : vector<8x1xf32>
    %c4_i32_60 = arith.constant 4 : i32
    %331 = vector.broadcast %c4_i32_60 : i32 to vector<8x5xi32>
    %332 = arith.cmpi eq, %205, %331 : vector<8x5xi32>
    %333 = vector.shape_cast %330 : vector<8x1xf32> to vector<8x1xf32>
    %334 = vector.broadcast %333 : vector<8x1xf32> to vector<8x5xf32>
    %335 = arith.select %332, %334, %305 : vector<8x5xi1>, vector<8x5xf32>
    %c0_61 = arith.constant 0 : index
    %c0_62 = arith.constant 0 : index
    %336 = vector.load %arg6[%c0_61, %c0_62] : memref<8x5xf32, #tpu.memory_space<vmem>>, vector<8x5xf32>
    tpu.vector_store %arg6[%c0_61, %c0_62], %335 {strides = array<i32>} : memref<8x5xf32, #tpu.memory_space<vmem>>, vector<8x5xf32>,
    return
  }
}

</mosaic_0001>

<llo_original>
// kernel: encoder_forward.1
$region0: #{encoder_forward.1}
  #allocation0 [shape = 'u32[]', space=smem, size = 0x4, offset = 0x4, fixed_abs, tag = 'smem constant byte address 0x4 - core index']
  #allocation1 [shape = 'u32[144,128]{1,0:T(1,128)}', space=vmem, size = 0x12000, scoped, tag = 'internal scratch']
  #allocation2 [shape = 'f32[1,1]{1,0:T(1,128)S(1)}', space=vmem, size = 0x200, scoped, tag = 'scoped memory for encoder_forward.1']
  %s0 = inlined_call_operand.vmem [shape: f32[8,8,1], index: 0, kind: input, shape index: {}]
  %s1 = inlined_call_operand.vmem [shape: f32[1,128], index: 1, kind: input, shape index: {}]
  %s2 = inlined_call_operand.vmem [shape: f32[32,128], index: 2, kind: input, shape index: {}]
  %s3 = inlined_call_operand.vmem [shape: f32[1,128], index: 3, kind: input, shape index: {}]
  %s4 = inlined_call_operand.vmem [shape: f32[1,32], index: 4, kind: input, shape index: {}]
  %s5 = inlined_call_operand.<no memory space> [shape: f32[1,1], index: 5, kind: input, shape index: {}]
  %s6 = inlined_call_operand.vmem [shape: f32[8,5], index: 6, kind: output, shape index: {}]
  %s7 = sld [smem:[#allocation0]]
  $region34: #{encoder_forward.1} parent=0
    _
  %s9 = ssub.s32 1, %s7
  %s10 = scalar_select 0, %s9, %s7
  %v11 = vstv %s5
  %12 = vst [vmem:[#allocation2] sm:$0x1] %v11
  // Predicated region
  $region2: #{encoder_forward.1} parent=0 // pred_check
    _
  $region3: #{encoder_forward.1} parent=0 // pred_check_branch
    %14 = sbr.rel (0) target = $region5
  $region4: #{encoder_forward.1} parent=0 // pred_region
    _
  $region5: #{encoder_forward.1} parent=0 // pred_fallthru
    _
  // Predicated region
  $region6: #{encoder_forward.1} parent=0 // pred_check
    _
  $region7: #{encoder_forward.1} parent=0 // pred_check_branch
    %16 = sbr.rel (0) target = $region9
  $region8: #{encoder_forward.1} parent=0 // pred_region
    _
  $region9: #{encoder_forward.1} parent=0 // pred_fallthru
    _
  // Predicated region
  $region10: #{encoder_forward.1} parent=0 // pred_check
    _
  $region11: #{encoder_forward.1} parent=0 // pred_check_branch
    %18 = sbr.rel (0) target = $region13
  $region12: #{encoder_forward.1} parent=0 // pred_region
    _
  $region13: #{encoder_forward.1} parent=0 // pred_fallthru
    _
  // Predicated region
  $region14: #{encoder_forward.1} parent=0 // pred_check
    _
  $region15: #{encoder_forward.1} parent=0 // pred_check_branch
    %20 = sbr.rel (0) target = $region17
  $region16: #{encoder_forward.1} parent=0 // pred_region
    _
  $region17: #{encoder_forward.1} parent=0 // pred_fallthru
    _
  // Predicated region
  $region18: #{encoder_forward.1} parent=0 // pred_check
    _
  $region19: #{encoder_forward.1} parent=0 // pred_check_branch
    %22 = sbr.rel (0) target = $region21
  $region20: #{encoder_forward.1} parent=0 // pred_region
    _
  $region21: #{encoder_forward.1} parent=0 // pred_fallthru
    _
  // Predicated region
  $region22: #{encoder_forward.1} parent=0 // pred_check
    _
  $region23: #{encoder_forward.1} parent=0 // pred_check_branch
    %24 = sbr.rel (0) target = $region25
  $region24: #{encoder_forward.1} parent=0 // pred_region
    _
  $region25: #{encoder_forward.1} parent=0 // pred_fallthru
    _
  %v25 = vld [vmem:[%s1] sm:$0x1]
  %v26 = vld [vmem:[%s2] sm:$0xff]
  %v27 = vld [vmem:[%s2 + $0x8] sm:$0xff]
  %v28 = vld [vmem:[%s2 + $0x10] sm:$0xff]
  %v29 = vld [vmem:[%s2 + $0x18] sm:$0xff]
  %v30 = vld [vmem:[%s3] sm:$0x1]
  %v31 = vld [vmem:[%s4] sm:$0x1]
  %v32 = vld [vmem:[#allocation2] sm:$0x1]
  %v34 = vlaneseq
  %v35 = vshrl.u32 %v34, 7
  %v36 = vsub.s32 0, %v35
  %v37 = vrot.slane %v30, %v36
  %v40 = vlaneseq
  %v41 = vshrl.u32 %v40, 7
  %v42 = vsub.s32 0, %v41
  %v43 = vrot.slane %v32, %v42
  %v46 = vlaneseq
  %v47 = vshrl.u32 %v46, 7
  %v48 = vsub.s32 0, %v47
  %v49 = vrot.slane %v31, %v48
  %v50 = vld [vmem:[%s0] sm:$0xff]
  %52 = vset.pattern.permute.xlu0 0
  %53 = vperm.xlu0 %52, %v50
  %v54 = vpop.permute.xlu0 %53
  %v57 = vlaneseq
  %v58 = vshrl.u32 %v57, 7
  %v59 = vsub.s32 0, %v58
  %v60 = vrot.slane %v25, %v59
  %v62 = vmul.f32 %v54, %v60
  %v63 = vadd.f32 %v62, %v37
  %vm64 = vcmask 261120
  %v66 = vsel %vm64, 0.0, 0
  %68 = vmatprep.subr.mxu0 0.0
  %69 = vmatpush1.msra.mxu0 0.0
  %70 = vmatprep.subr.mxu0 0.0
  %71 = vmatpush1.msra.mxu0 0.0
  %72 = vmatprep.subr.mxu0 0.0
  %73 = vmatpush1.msra.mxu0 0.0
  %74 = vmatprep.subr.mxu0 0.0
  %75 = vmatpush1.msra.mxu0 0.0
  %76 = vmatprep.subr.mxu0 0.0
  %77 = vmatpush1.msra.mxu0 0.0
  %78 = vmatprep.subr.mxu0 0.0
  %79 = vmatpush1.msra.mxu0 0.0
  %80 = vmatprep.subr.mxu0 0.0
  %81 = vmatpush1.msra.mxu0 0.0
  %82 = vmatprep.subr.mxu0 0.0
  %83 = vmatpush1.msra.mxu0 0.0
  %84 = vmatprep.subr.mxu0 0.0
  %85 = vmatpush1.msra.mxu0 0.0
  %86 = vmatprep.subr.mxu0 0.0
  %87 = vmatpush1.msra.mxu0 0.0
  %88 = vmatprep.subr.mxu0 0.0
  %89 = vmatpush1.msra.mxu0 0.0
  %90 = vmatprep.subr.mxu0 0.0
  %91 = vmatpush1.msra.mxu0 0.0
  %92 = vmatprep.subr.mxu0 0.0
  %93 = vmatpush1.msra.mxu0 %v29
  %94 = vmatprep.subr.mxu0 0.0
  %95 = vmatpush1.msra.mxu0 %v28
  %96 = vmatprep.subr.mxu0 0.0
  %97 = vmatpush1.msra.mxu0 %v27
  %98 = vmatprep.subr.mxu0 0.0
  %99 = vmatpush1.msra.mxu0 %v26
  %100 = vmatprep.subr.mxu0 0.0
  %101 = vmatpush2.msra.mxu0 0.0
  %102 = vmatprep.subr.mxu0 0.0
  %103 = vmatpush2.msra.mxu0 0.0
  %104 = vmatprep.subr.mxu0 0.0
  %105 = vmatpush2.msra.mxu0 0.0
  %106 = vmatprep.subr.mxu0 0.0
  %107 = vmatpush2.msra.mxu0 0.0
  %108 = vmatprep.subr.mxu0 0.0
  %109 = vmatpush2.msra.mxu0 0.0
  %110 = vmatprep.subr.mxu0 0.0
  %111 = vmatpush2.msra.mxu0 0.0
  %112 = vmatprep.subr.mxu0 0.0
  %113 = vmatpush2.msra.mxu0 0.0
  %114 = vmatprep.subr.mxu0 0.0
  %115 = vmatpush2.msra.mxu0 0.0
  %116 = vmatprep.subr.mxu0 0.0
  %117 = vmatpush2.msra.mxu0 0.0
  %118 = vmatprep.subr.mxu0 0.0
  %119 = vmatpush2.msra.mxu0 0.0
  %120 = vmatprep.subr.mxu0 0.0
  %121 = vmatpush2.msra.mxu0 0.0
  %122 = vmatprep.subr.mxu0 0.0
  %123 = vmatpush2.msra.mxu0 0.0
  %124 = vmatprep.subr.mxu0 0.0
  %125 = vmatpush2.msra.mxu0 0.0
  %126 = vmatprep.subr.mxu0 0.0
  %127 = vmatpush2.msra.mxu0 0.0
  %128 = vmatprep.subr.mxu0 0.0
  %129 = vmatpush2.msra.mxu0 0.0
  %130 = vmatprep.subr.mxu0 0.0
  %131 = vmatpush2.msra.mxu0 0.0
  %132 = vmatprep.mubr.f32.mxu0 0.0
  %133 = vmatmul.mubr.f32.gmra.mxu0 %v66
  %v134 = vpop.f32.mrf.mxu0
  %v135 = vadd.f32 %v63, %v134
  %v136 = vpop.f32.mrf.mxu0
  %137 = vdwg.mxu0
  %v138 = vxor.u32 %v135, 2147483648
  %v139 = vmul.f32 %v138, 1.442695
  %v140 = vpow.pop %v139
  %v141 = vadd.f32 %v140, 1.0
  %v142 = vrcp.pop %v141
  %v143 = vmul.f32 1.0, %v142
  %v144 = vtanh.pop %v135
  %v145 = vmul.f32 %v143, 0.0
  %147 = vrot.lane.b32.xlu0 %v144, 64
  %v148 = vpop.permute.xlu0 %147
  %v150 = vmul.f32 %v143, %v148
  %152 = vrot.lane.b32.xlu0 %v150, 32
  %v153 = vpop.permute.xlu0 %152
  %v155 = vadd.f32 %v145, %v153
  %v156 = vtanh.pop %v155
  %158 = vrot.lane.b32.xlu0 %v156, 64
  %v159 = vpop.permute.xlu0 %158
  %v161 = vmul.f32 %v143, %v159
  %s162 = scalar_lea.vmem %s0, 8
  %v163 = vld [vmem:[%s162] sm:$0xff]
  %165 = vset.pattern.permute.xlu0 0
  %166 = vperm.xlu0 %165, %v163
  %v167 = vpop.permute.xlu0 %166
  %v169 = vmul.f32 %v167, %v60
  %v170 = vadd.f32 %v169, %v37
  %172 = vrot.lane.b32.xlu0 %v161, 32
  %v173 = vpop.permute.xlu0 %172
  %v174 = vsel %vm64, %v173, 0
  %176 = vmatprep.subr.mxu0 0.0
  %177 = vmatpush1.msra.mxu0 0.0
  %178 = vmatprep.subr.mxu0 0.0
  %179 = vmatpush1.msra.mxu0 0.0
  %180 = vmatprep.subr.mxu0 0.0
  %181 = vmatpush1.msra.mxu0 0.0
  %182 = vmatprep.subr.mxu0 0.0
  %183 = vmatpush1.msra.mxu0 0.0
  %184 = vmatprep.subr.mxu0 0.0
  %185 = vmatpush1.msra.mxu0 0.0
  %186 = vmatprep.subr.mxu0 0.0
  %187 = vmatpush1.msra.mxu0 0.0
  %188 = vmatprep.subr.mxu0 0.0
  %189 = vmatpush1.msra.mxu0 0.0
  %190 = vmatprep.subr.mxu0 0.0
  %191 = vmatpush1.msra.mxu0 0.0
  %192 = vmatprep.subr.mxu0 0.0
  %193 = vmatpush1.msra.mxu0 0.0
  %194 = vmatprep.subr.mxu0 0.0
  %195 = vmatpush1.msra.mxu0 0.0
  %196 = vmatprep.subr.mxu0 0.0
  %197 = vmatpush1.msra.mxu0 0.0
  %198 = vmatprep.subr.mxu0 0.0
  %199 = vmatpush1.msra.mxu0 0.0
  %200 = vmatprep.subr.mxu0 0.0
  %201 = vmatpush1.msra.mxu0 %v29
  %202 = vmatprep.subr.mxu0 0.0
  %203 = vmatpush1.msra.mxu0 %v28
  %204 = vmatprep.subr.mxu0 0.0
  %205 = vmatpush1.msra.mxu0 %v27
  %206 = vmatprep.subr.mxu0 0.0
  %207 = vmatpush1.msra.mxu0 %v26
  %208 = vmatprep.subr.mxu0 0.0
  %209 = vmatpush2.msra.mxu0 0.0
  %210 = vmatprep.subr.mxu0 0.0
  %211 = vmatpush2.msra.mxu0 0.0
  %212 = vmatprep.subr.mxu0 0.0
  %213 = vmatpush2.msra.mxu0 0.0
  %214 = vmatprep.subr.mxu0 0.0
  %215 = vmatpush2.msra.mxu0 0.0
  %216 = vmatprep.subr.mxu0 0.0
  %217 = vmatpush2.msra.mxu0 0.0
  %218 = vmatprep.subr.mxu0 0.0
  %219 = vmatpush2.msra.mxu0 0.0
  %220 = vmatprep.subr.mxu0 0.0
  %221 = vmatpush2.msra.mxu0 0.0
  %222 = vmatprep.subr.mxu0 0.0
  %223 = vmatpush2.msra.mxu0 0.0
  %224 = vmatprep.subr.mxu0 0.0
  %225 = vmatpush2.msra.mxu0 0.0
  %226 = vmatprep.subr.mxu0 0.0
  %227 = vmatpush2.msra.mxu0 0.0
  %228 = vmatprep.subr.mxu0 0.0
  %229 = vmatpush2.msra.mxu0 0.0
  %230 = vmatprep.subr.mxu0 0.0
  %231 = vmatpush2.msra.mxu0 0.0
  %232 = vmatprep.subr.mxu0 0.0
  %233 = vmatpush2.msra.mxu0 0.0
  %234 = vmatprep.subr.mxu0 0.0
  %235 = vmatpush2.msra.mxu0 0.0
  %236 = vmatprep.subr.mxu0 0.0
  %237 = vmatpush2.msra.mxu0 0.0
  %238 = vmatprep.subr.mxu0 0.0
  %239 = vmatpush2.msra.mxu0 0.0
  %240 = vmatprep.mubr.f32.mxu0 0.0
  %241 = vmatmul.mubr.f32.gmra.mxu0 %v174
  %v242 = vpop.f32.mrf.mxu0
  %v243 = vadd.f32 %v170, %v242
  %v244 = vpop.f32.mrf.mxu0
  %245 = vdwg.mxu0
  %v246 = vxor.u32 %v243, 2147483648
  %v247 = vmul.f32 %v246, 1.442695
  %v248 = vpow.pop %v247
  %v249 = vadd.f32 %v248, 1.0
  %v250 = vrcp.pop %v249
  %v251 = vmul.f32 1.0, %v250
  %v252 = vtanh.pop %v243
  %v253 = vmul.f32 %v251, %v155
  %255 = vrot.lane.b32.xlu0 %v252, 64
  %v256 = vpop.permute.xlu0 %255
  %v258 = vmul.f32 %v251, %v256
  %260 = vrot.lane.b32.xlu0 %v258, 32
  %v261 = vpop.permute.xlu0 %260
  %v263 = vadd.f32 %v253, %v261
  %v264 = vtanh.pop %v263
  %266 = vrot.lane.b32.xlu0 %v264, 64
  %v267 = vpop.permute.xlu0 %266
  %v269 = vmul.f32 %v251, %v267
  %s270 = scalar_lea.vmem %s0, 16
  %v271 = vld [vmem:[%s270] sm:$0xff]
  %273 = vset.pattern.permute.xlu0 0
  %274 = vperm.xlu0 %273, %v271
  %v275 = vpop.permute.xlu0 %274
  %v277 = vmul.f32 %v275, %v60
  %v278 = vadd.f32 %v277, %v37
  %280 = vrot.lane.b32.xlu0 %v269, 32
  %v281 = vpop.permute.xlu0 %280
  %v282 = vsel %vm64, %v281, 0
  %284 = vmatprep.subr.mxu0 0.0
  %285 = vmatpush1.msra.mxu0 0.0
  %286 = vmatprep.subr.mxu0 0.0
  %287 = vmatpush1.msra.mxu0 0.0
  %288 = vmatprep.subr.mxu0 0.0
  %289 = vmatpush1.msra.mxu0 0.0
  %290 = vmatprep.subr.mxu0 0.0
  %291 = vmatpush1.msra.mxu0 0.0
  %292 = vmatprep.subr.mxu0 0.0
  %293 = vmatpush1.msra.mxu0 0.0
  %294 = vmatprep.subr.mxu0 0.0
  %295 = vmatpush1.msra.mxu0 0.0
  %296 = vmatprep.subr.mxu0 0.0
  %297 = vmatpush1.msra.mxu0 0.0
  %298 = vmatprep.subr.mxu0 0.0
  %299 = vmatpush1.msra.mxu0 0.0
  %300 = vmatprep.subr.mxu0 0.0
  %301 = vmatpush1.msra.mxu0 0.0
  %302 = vmatprep.subr.mxu0 0.0
  %303 = vmatpush1.msra.mxu0 0.0
  %304 = vmatprep.subr.mxu0 0.0
  %305 = vmatpush1.msra.mxu0 0.0
  %306 = vmatprep.subr.mxu0 0.0
  %307 = vmatpush1.msra.mxu0 0.0
  %308 = vmatprep.subr.mxu0 0.0
  %309 = vmatpush1.msra.mxu0 %v29
  %310 = vmatprep.subr.mxu0 0.0
  %311 = vmatpush1.msra.mxu0 %v28
  %312 = vmatprep.subr.mxu0 0.0
  %313 = vmatpush1.msra.mxu0 %v27
  %314 = vmatprep.subr.mxu0 0.0
  %315 = vmatpush1.msra.mxu0 %v26
  %316 = vmatprep.subr.mxu0 0.0
  %317 = vmatpush2.msra.mxu0 0.0
  %318 = vmatprep.subr.mxu0 0.0
  %319 = vmatpush2.msra.mxu0 0.0
  %320 = vmatprep.subr.mxu0 0.0
  %321 = vmatpush2.msra.mxu0 0.0
  %322 = vmatprep.subr.mxu0 0.0
  %323 = vmatpush2.msra.mxu0 0.0
  %324 = vmatprep.subr.mxu0 0.0
  %325 = vmatpush2.msra.mxu0 0.0
  %326 = vmatprep.subr.mxu0 0.0
  %327 = vmatpush2.msra.mxu0 0.0
  %328 = vmatprep.subr.mxu0 0.0
  %329 = vmatpush2.msra.mxu0 0.0
  %330 = vmatprep.subr.mxu0 0.0
  %331 = vmatpush2.msra.mxu0 0.0
  %332 = vmatprep.subr.mxu0 0.0
  %333 = vmatpush2.msra.mxu0 0.0
  %334 = vmatprep.subr.mxu0 0.0
  %335 = vmatpush2.msra.mxu0 0.0
  %336 = vmatprep.subr.mxu0 0.0
  %337 = vmatpush2.msra.mxu0 0.0
  %338 = vmatprep.subr.mxu0 0.0
  %339 = vmatpush2.msra.mxu0 0.0
  %340 = vmatprep.subr.mxu0 0.0
  %341 = vmatpush2.msra.mxu0 0.0
  %342 = vmatprep.subr.mxu0 0.0
  %343 = vmatpush2.msra.mxu0 0.0
  %344 = vmatprep.subr.mxu0 0.0
  %345 = vmatpush2.msra.mxu0 0.0
  %346 = vmatprep.subr.mxu0 0.0
  %347 = vmatpush2.msra.mxu0 0.0
  %348 = vmatprep.mubr.f32.mxu0 0.0
  %349 = vmatmul.mubr.f32.gmra.mxu0 %v282
  %v350 = vpop.f32.mrf.mxu0
  %v351 = vadd.f32 %v278, %v350
  %v352 = vpop.f32.mrf.mxu0
  %353 = vdwg.mxu0
  %v354 = vxor.u32 %v351, 2147483648
  %v355 = vmul.f32 %v354, 1.442695
  %v356 = vpow.pop %v355
  %v357 = vadd.f32 %v356, 1.0
  %v358 = vrcp.pop %v357
  %v359 = vmul.f32 1.0, %v358
  %v360 = vtanh.pop %v351
  %v361 = vmul.f32 %v359, %v263
  %363 = vrot.lane.b32.xlu0 %v360, 64
  %v364 = vpop.permute.xlu0 %363
  %v366 = vmul.f32 %v359, %v364
  %368 = vrot.lane.b32.xlu0 %v366, 32
  %v369 = vpop.permute.xlu0 %368
  %v371 = vadd.f32 %v361, %v369
  %v372 = vtanh.pop %v371
  %374 = vrot.lane.b32.xlu0 %v372, 64
  %v375 = vpop.permute.xlu0 %374
  %v377 = vmul.f32 %v359, %v375
  %s378 = scalar_lea.vmem %s0, 24
  %v379 = vld [vmem:[%s378] sm:$0xff]
  %381 = vset.pattern.permute.xlu0 0
  %382 = vperm.xlu0 %381, %v379
  %v383 = vpop.permute.xlu0 %382
  %v385 = vmul.f32 %v383, %v60
  %v386 = vadd.f32 %v385, %v37
  %388 = vrot.lane.b32.xlu0 %v377, 32
  %v389 = vpop.permute.xlu0 %388
  %v390 = vsel %vm64, %v389, 0
  %392 = vmatprep.subr.mxu0 0.0
  %393 = vmatpush1.msra.mxu0 0.0
  %394 = vmatprep.subr.mxu0 0.0
  %395 = vmatpush1.msra.mxu0 0.0
  %396 = vmatprep.subr.mxu0 0.0
  %397 = vmatpush1.msra.mxu0 0.0
  %398 = vmatprep.subr.mxu0 0.0
  %399 = vmatpush1.msra.mxu0 0.0
  %400 = vmatprep.subr.mxu0 0.0
  %401 = vmatpush1.msra.mxu0 0.0
  %402 = vmatprep.subr.mxu0 0.0
  %403 = vmatpush1.msra.mxu0 0.0
  %404 = vmatprep.subr.mxu0 0.0
  %405 = vmatpush1.msra.mxu0 0.0
  %406 = vmatprep.subr.mxu0 0.0
  %407 = vmatpush1.msra.mxu0 0.0
  %408 = vmatprep.subr.mxu0 0.0
  %409 = vmatpush1.msra.mxu0 0.0
  %410 = vmatprep.subr.mxu0 0.0
  %411 = vmatpush1.msra.mxu0 0.0
  %412 = vmatprep.subr.mxu0 0.0
  %413 = vmatpush1.msra.mxu0 0.0
  %414 = vmatprep.subr.mxu0 0.0
  %415 = vmatpush1.msra.mxu0 0.0
  %416 = vmatprep.subr.mxu0 0.0
  %417 = vmatpush1.msra.mxu0 %v29
  %418 = vmatprep.subr.mxu0 0.0
  %419 = vmatpush1.msra.mxu0 %v28
  %420 = vmatprep.subr.mxu0 0.0
  %421 = vmatpush1.msra.mxu0 %v27
  %422 = vmatprep.subr.mxu0 0.0
  %423 = vmatpush1.msra.mxu0 %v26
  %424 = vmatprep.subr.mxu0 0.0
  %425 = vmatpush2.msra.mxu0 0.0
  %426 = vmatprep.subr.mxu0 0.0
  %427 = vmatpush2.msra.mxu0 0.0
  %428 = vmatprep.subr.mxu0 0.0
  %429 = vmatpush2.msra.mxu0 0.0
  %430 = vmatprep.subr.mxu0 0.0
  %431 = vmatpush2.msra.mxu0 0.0
  %432 = vmatprep.subr.mxu0 0.0
  %433 = vmatpush2.msra.mxu0 0.0
  %434 = vmatprep.subr.mxu0 0.0
  %435 = vmatpush2.msra.mxu0 0.0
  %436 = vmatprep.subr.mxu0 0.0
  %437 = vmatpush2.msra.mxu0 0.0
  %438 = vmatprep.subr.mxu0 0.0
  %439 = vmatpush2.msra.mxu0 0.0
  %440 = vmatprep.subr.mxu0 0.0
  %441 = vmatpush2.msra.mxu0 0.0
  %442 = vmatprep.subr.mxu0 0.0
  %443 = vmatpush2.msra.mxu0 0.0
  %444 = vmatprep.subr.mxu0 0.0
  %445 = vmatpush2.msra.mxu0 0.0
  %446 = vmatprep.subr.mxu0 0.0
  %447 = vmatpush2.msra.mxu0 0.0
  %448 = vmatprep.subr.mxu0 0.0
  %449 = vmatpush2.msra.mxu0 0.0
  %450 = vmatprep.subr.mxu0 0.0
  %451 = vmatpush2.msra.mxu0 0.0
  %452 = vmatprep.subr.mxu0 0.0
  %453 = vmatpush2.msra.mxu0 0.0
  %454 = vmatprep.subr.mxu0 0.0
  %455 = vmatpush2.msra.mxu0 0.0
  %456 = vmatprep.mubr.f32.mxu0 0.0
  %457 = vmatmul.mubr.f32.gmra.mxu0 %v390
  %v458 = vpop.f32.mrf.mxu0
  %v459 = vadd.f32 %v386, %v458
  %v460 = vpop.f32.mrf.mxu0
  %461 = vdwg.mxu0
  %v462 = vxor.u32 %v459, 2147483648
  %v463 = vmul.f32 %v462, 1.442695
  %v464 = vpow.pop %v463
  %v465 = vadd.f32 %v464, 1.0
  %v466 = vrcp.pop %v465
  %v467 = vmul.f32 1.0, %v466
  %v468 = vtanh.pop %v459
  %v469 = vmul.f32 %v467, %v371
  %471 = vrot.lane.b32.xlu0 %v468, 64
  %v472 = vpop.permute.xlu0 %471
  %v474 = vmul.f32 %v467, %v472
  %476 = vrot.lane.b32.xlu0 %v474, 32
  %v477 = vpop.permute.xlu0 %476
  %v479 = vadd.f32 %v469, %v477
  %v480 = vtanh.pop %v479
  %482 = vrot.lane.b32.xlu0 %v480, 64
  %v483 = vpop.permute.xlu0 %482
  %v485 = vmul.f32 %v467, %v483
  %s486 = scalar_lea.vmem %s0, 32
  %v487 = vld [vmem:[%s486] sm:$0xff]
  %489 = vset.pattern.permute.xlu0 0
  %490 = vperm.xlu0 %489, %v487
  %v491 = vpop.permute.xlu0 %490
  %v493 = vmul.f32 %v491, %v60
  %v494 = vadd.f32 %v493, %v37
  %496 = vrot.lane.b32.xlu0 %v485, 32
  %v497 = vpop.permute.xlu0 %496
  %v498 = vsel %vm64, %v497, 0
  %500 = vmatprep.subr.mxu0 0.0
  %501 = vmatpush1.msra.mxu0 0.0
  %502 = vmatprep.subr.mxu0 0.0
  %503 = vmatpush1.msra.mxu0 0.0
  %504 = vmatprep.subr.mxu0 0.0
  %505 = vmatpush1.msra.mxu0 0.0
  %506 = vmatprep.subr.mxu0 0.0
  %507 = vmatpush1.msra.mxu0 0.0
  %508 = vmatprep.subr.mxu0 0.0
  %509 = vmatpush1.msra.mxu0 0.0
  %510 = vmatprep.subr.mxu0 0.0
  %511 = vmatpush1.msra.mxu0 0.0
  %512 = vmatprep.subr.mxu0 0.0
  %513 = vmatpush1.msra.mxu0 0.0
  %514 = vmatprep.subr.mxu0 0.0
  %515 = vmatpush1.msra.mxu0 0.0
  %516 = vmatprep.subr.mxu0 0.0
  %517 = vmatpush1.msra.mxu0 0.0
  %518 = vmatprep.subr.mxu0 0.0
  %519 = vmatpush1.msra.mxu0 0.0
  %520 = vmatprep.subr.mxu0 0.0
  %521 = vmatpush1.msra.mxu0 0.0
  %522 = vmatprep.subr.mxu0 0.0
  %523 = vmatpush1.msra.mxu0 0.0
  %524 = vmatprep.subr.mxu0 0.0
  %525 = vmatpush1.msra.mxu0 %v29
  %526 = vmatprep.subr.mxu0 0.0
  %527 = vmatpush1.msra.mxu0 %v28
  %528 = vmatprep.subr.mxu0 0.0
  %529 = vmatpush1.msra.mxu0 %v27
  %530 = vmatprep.subr.mxu0 0.0
  %531 = vmatpush1.msra.mxu0 %v26
  %532 = vmatprep.subr.mxu0 0.0
  %533 = vmatpush2.msra.mxu0 0.0
  %534 = vmatprep.subr.mxu0 0.0
  %535 = vmatpush2.msra.mxu0 0.0
  %536 = vmatprep.subr.mxu0 0.0
  %537 = vmatpush2.msra.mxu0 0.0
  %538 = vmatprep.subr.mxu0 0.0
  %539 = vmatpush2.msra.mxu0 0.0
  %540 = vmatprep.subr.mxu0 0.0
  %541 = vmatpush2.msra.mxu0 0.0
  %542 = vmatprep.subr.mxu0 0.0
  %543 = vmatpush2.msra.mxu0 0.0
  %544 = vmatprep.subr.mxu0 0.0
  %545 = vmatpush2.msra.mxu0 0.0
  %546 = vmatprep.subr.mxu0 0.0
  %547 = vmatpush2.msra.mxu0 0.0
  %548 = vmatprep.subr.mxu0 0.0
  %549 = vmatpush2.msra.mxu0 0.0
  %550 = vmatprep.subr.mxu0 0.0
  %551 = vmatpush2.msra.mxu0 0.0
  %552 = vmatprep.subr.mxu0 0.0
  %553 = vmatpush2.msra.mxu0 0.0
  %554 = vmatprep.subr.mxu0 0.0
  %555 = vmatpush2.msra.mxu0 0.0
  %556 = vmatprep.subr.mxu0 0.0
  %557 = vmatpush2.msra.mxu0 0.0
  %558 = vmatprep.subr.mxu0 0.0
  %559 = vmatpush2.msra.mxu0 0.0
  %560 = vmatprep.subr.mxu0 0.0
  %561 = vmatpush2.msra.mxu0 0.0
  %562 = vmatprep.subr.mxu0 0.0
  %563 = vmatpush2.msra.mxu0 0.0
  %564 = vmatprep.mubr.f32.mxu0 0.0
  %565 = vmatmul.mubr.f32.gmra.mxu0 %v498
  %v566 = vpop.f32.mrf.mxu0
  %v567 = vadd.f32 %v494, %v566
  %v568 = vpop.f32.mrf.mxu0
  %569 = vdwg.mxu0
  %v570 = vxor.u32 %v567, 2147483648
  %v571 = vmul.f32 %v570, 1.442695
  %v572 = vpow.pop %v571
  %v573 = vadd.f32 %v572, 1.0
  %v574 = vrcp.pop %v573
  %v575 = vmul.f32 1.0, %v574
  %v576 = vtanh.pop %v567
  %v577 = vmul.f32 %v575, %v479
  %579 = vrot.lane.b32.xlu0 %v576, 64
  %v580 = vpop.permute.xlu0 %579
  %v582 = vmul.f32 %v575, %v580
  %584 = vrot.lane.b32.xlu0 %v582, 32
  %v585 = vpop.permute.xlu0 %584
  %v587 = vadd.f32 %v577, %v585
  %v588 = vtanh.pop %v587
  %590 = vrot.lane.b32.xlu0 %v588, 64
  %v591 = vpop.permute.xlu0 %590
  %v593 = vmul.f32 %v575, %v591
  %s594 = scalar_lea.vmem %s0, 40
  %v595 = vld [vmem:[%s594] sm:$0xff]
  %597 = vset.pattern.permute.xlu0 0
  %598 = vperm.xlu0 %597, %v595
  %v599 = vpop.permute.xlu0 %598
  %v601 = vmul.f32 %v599, %v60
  %v602 = vadd.f32 %v601, %v37
  %604 = vrot.lane.b32.xlu0 %v593, 32
  %v605 = vpop.permute.xlu0 %604
  %v606 = vsel %vm64, %v605, 0
  %608 = vmatprep.subr.mxu0 0.0
  %609 = vmatpush1.msra.mxu0 0.0
  %610 = vmatprep.subr.mxu0 0.0
  %611 = vmatpush1.msra.mxu0 0.0
  %612 = vmatprep.subr.mxu0 0.0
  %613 = vmatpush1.msra.mxu0 0.0
  %614 = vmatprep.subr.mxu0 0.0
  %615 = vmatpush1.msra.mxu0 0.0
  %616 = vmatprep.subr.mxu0 0.0
  %617 = vmatpush1.msra.mxu0 0.0
  %618 = vmatprep.subr.mxu0 0.0
  %619 = vmatpush1.msra.mxu0 0.0
  %620 = vmatprep.subr.mxu0 0.0
  %621 = vmatpush1.msra.mxu0 0.0
  %622 = vmatprep.subr.mxu0 0.0
  %623 = vmatpush1.msra.mxu0 0.0
  %624 = vmatprep.subr.mxu0 0.0
  %625 = vmatpush1.msra.mxu0 0.0
  %626 = vmatprep.subr.mxu0 0.0
  %627 = vmatpush1.msra.mxu0 0.0
  %628 = vmatprep.subr.mxu0 0.0
  %629 = vmatpush1.msra.mxu0 0.0
  %630 = vmatprep.subr.mxu0 0.0
  %631 = vmatpush1.msra.mxu0 0.0
  %632 = vmatprep.subr.mxu0 0.0
  %633 = vmatpush1.msra.mxu0 %v29
  %634 = vmatprep.subr.mxu0 0.0
  %635 = vmatpush1.msra.mxu0 %v28
  %636 = vmatprep.subr.mxu0 0.0
  %637 = vmatpush1.msra.mxu0 %v27
  %638 = vmatprep.subr.mxu0 0.0
  %639 = vmatpush1.msra.mxu0 %v26
  %640 = vmatprep.subr.mxu0 0.0
  %641 = vmatpush2.msra.mxu0 0.0
  %642 = vmatprep.subr.mxu0 0.0
  %643 = vmatpush2.msra.mxu0 0.0
  %644 = vmatprep.subr.mxu0 0.0
  %645 = vmatpush2.msra.mxu0 0.0
  %646 = vmatprep.subr.mxu0 0.0
  %647 = vmatpush2.msra.mxu0 0.0
  %648 = vmatprep.subr.mxu0 0.0
  %649 = vmatpush2.msra.mxu0 0.0
  %650 = vmatprep.subr.mxu0 0.0
  %651 = vmatpush2.msra.mxu0 0.0
  %652 = vmatprep.subr.mxu0 0.0
  %653 = vmatpush2.msra.mxu0 0.0
  %654 = vmatprep.subr.mxu0 0.0
  %655 = vmatpush2.msra.mxu0 0.0
  %656 = vmatprep.subr.mxu0 0.0
  %657 = vmatpush2.msra.mxu0 0.0
  %658 = vmatprep.subr.mxu0 0.0
  %659 = vmatpush2.msra.mxu0 0.0
  %660 = vmatprep.subr.mxu0 0.0
  %661 = vmatpush2.msra.mxu0 0.0
  %662 = vmatprep.subr.mxu0 0.0
  %663 = vmatpush2.msra.mxu0 0.0
  %664 = vmatprep.subr.mxu0 0.0
  %665 = vmatpush2.msra.mxu0 0.0
  %666 = vmatprep.subr.mxu0 0.0
  %667 = vmatpush2.msra.mxu0 0.0
  %668 = vmatprep.subr.mxu0 0.0
  %669 = vmatpush2.msra.mxu0 0.0
  %670 = vmatprep.subr.mxu0 0.0
  %671 = vmatpush2.msra.mxu0 0.0
  %672 = vmatprep.mubr.f32.mxu0 0.0
  %673 = vmatmul.mubr.f32.gmra.mxu0 %v606
  %v674 = vpop.f32.mrf.mxu0
  %v675 = vadd.f32 %v602, %v674
  %v676 = vpop.f32.mrf.mxu0
  %677 = vdwg.mxu0
  %v678 = vxor.u32 %v675, 2147483648
  %v679 = vmul.f32 %v678, 1.442695
  %v680 = vpow.pop %v679
  %v681 = vadd.f32 %v680, 1.0
  %v682 = vrcp.pop %v681
  %v683 = vmul.f32 1.0, %v682
  %v684 = vtanh.pop %v675
  %v685 = vmul.f32 %v683, %v587
  %687 = vrot.lane.b32.xlu0 %v684, 64
  %v688 = vpop.permute.xlu0 %687
  %v690 = vmul.f32 %v683, %v688
  %692 = vrot.lane.b32.xlu0 %v690, 32
  %v693 = vpop.permute.xlu0 %692
  %v695 = vadd.f32 %v685, %v693
  %v696 = vtanh.pop %v695
  %698 = vrot.lane.b32.xlu0 %v696, 64
  %v699 = vpop.permute.xlu0 %698
  %v701 = vmul.f32 %v683, %v699
  %s702 = scalar_lea.vmem %s0, 48
  %v703 = vld [vmem:[%s702] sm:$0xff]
  %705 = vset.pattern.permute.xlu0 0
  %706 = vperm.xlu0 %705, %v703
  %v707 = vpop.permute.xlu0 %706
  %v709 = vmul.f32 %v707, %v60
  %v710 = vadd.f32 %v709, %v37
  %712 = vrot.lane.b32.xlu0 %v701, 32
  %v713 = vpop.permute.xlu0 %712
  %v714 = vsel %vm64, %v713, 0
  %716 = vmatprep.subr.mxu0 0.0
  %717 = vmatpush1.msra.mxu0 0.0
  %718 = vmatprep.subr.mxu0 0.0
  %719 = vmatpush1.msra.mxu0 0.0
  %720 = vmatprep.subr.mxu0 0.0
  %721 = vmatpush1.msra.mxu0 0.0
  %722 = vmatprep.subr.mxu0 0.0
  %723 = vmatpush1.msra.mxu0 0.0
  %724 = vmatprep.subr.mxu0 0.0
  %725 = vmatpush1.msra.mxu0 0.0
  %726 = vmatprep.subr.mxu0 0.0
  %727 = vmatpush1.msra.mxu0 0.0
  %728 = vmatprep.subr.mxu0 0.0
  %729 = vmatpush1.msra.mxu0 0.0
  %730 = vmatprep.subr.mxu0 0.0
  %731 = vmatpush1.msra.mxu0 0.0
  %732 = vmatprep.subr.mxu0 0.0
  %733 = vmatpush1.msra.mxu0 0.0
  %734 = vmatprep.subr.mxu0 0.0
  %735 = vmatpush1.msra.mxu0 0.0
  %736 = vmatprep.subr.mxu0 0.0
  %737 = vmatpush1.msra.mxu0 0.0
  %738 = vmatprep.subr.mxu0 0.0
  %739 = vmatpush1.msra.mxu0 0.0
  %740 = vmatprep.subr.mxu0 0.0
  %741 = vmatpush1.msra.mxu0 %v29
  %742 = vmatprep.subr.mxu0 0.0
  %743 = vmatpush1.msra.mxu0 %v28
  %744 = vmatprep.subr.mxu0 0.0
  %745 = vmatpush1.msra.mxu0 %v27
  %746 = vmatprep.subr.mxu0 0.0
  %747 = vmatpush1.msra.mxu0 %v26
  %748 = vmatprep.subr.mxu0 0.0
  %749 = vmatpush2.msra.mxu0 0.0
  %750 = vmatprep.subr.mxu0 0.0
  %751 = vmatpush2.msra.mxu0 0.0
  %752 = vmatprep.subr.mxu0 0.0
  %753 = vmatpush2.msra.mxu0 0.0
  %754 = vmatprep.subr.mxu0 0.0
  %755 = vmatpush2.msra.mxu0 0.0
  %756 = vmatprep.subr.mxu0 0.0
  %757 = vmatpush2.msra.mxu0 0.0
  %758 = vmatprep.subr.mxu0 0.0
  %759 = vmatpush2.msra.mxu0 0.0
  %760 = vmatprep.subr.mxu0 0.0
  %761 = vmatpush2.msra.mxu0 0.0
  %762 = vmatprep.subr.mxu0 0.0
  %763 = vmatpush2.msra.mxu0 0.0
  %764 = vmatprep.subr.mxu0 0.0
  %765 = vmatpush2.msra.mxu0 0.0
  %766 = vmatprep.subr.mxu0 0.0
  %767 = vmatpush2.msra.mxu0 0.0
  %768 = vmatprep.subr.mxu0 0.0
  %769 = vmatpush2.msra.mxu0 0.0
  %770 = vmatprep.subr.mxu0 0.0
  %771 = vmatpush2.msra.mxu0 0.0
  %772 = vmatprep.subr.mxu0 0.0
  %773 = vmatpush2.msra.mxu0 0.0
  %774 = vmatprep.subr.mxu0 0.0
  %775 = vmatpush2.msra.mxu0 0.0
  %776 = vmatprep.subr.mxu0 0.0
  %777 = vmatpush2.msra.mxu0 0.0
  %778 = vmatprep.subr.mxu0 0.0
  %779 = vmatpush2.msra.mxu0 0.0
  %780 = vmatprep.mubr.f32.mxu0 0.0
  %781 = vmatmul.mubr.f32.gmra.mxu0 %v714
  %v782 = vpop.f32.mrf.mxu0
  %v783 = vadd.f32 %v710, %v782
  %v784 = vpop.f32.mrf.mxu0
  %785 = vdwg.mxu0
  %v786 = vxor.u32 %v783, 2147483648
  %v787 = vmul.f32 %v786, 1.442695
  %v788 = vpow.pop %v787
  %v789 = vadd.f32 %v788, 1.0
  %v790 = vrcp.pop %v789
  %v791 = vmul.f32 1.0, %v790
  %v792 = vtanh.pop %v783
  %v793 = vmul.f32 %v791, %v695
  %795 = vrot.lane.b32.xlu0 %v792, 64
  %v796 = vpop.permute.xlu0 %795
  %v798 = vmul.f32 %v791, %v796
  %800 = vrot.lane.b32.xlu0 %v798, 32
  %v801 = vpop.permute.xlu0 %800
  %v803 = vadd.f32 %v793, %v801
  %v804 = vtanh.pop %v803
  %806 = vrot.lane.b32.xlu0 %v804, 64
  %v807 = vpop.permute.xlu0 %806
  %v809 = vmul.f32 %v791, %v807
  %s810 = scalar_lea.vmem %s0, 56
  %v811 = vld [vmem:[%s810] sm:$0xff]
  %813 = vset.pattern.permute.xlu0 0
  %814 = vperm.xlu0 %813, %v811
  %v815 = vpop.permute.xlu0 %814
  %v817 = vmul.f32 %v815, %v60
  %v818 = vadd.f32 %v817, %v37
  %820 = vrot.lane.b32.xlu0 %v809, 32
  %v821 = vpop.permute.xlu0 %820
  %v822 = vsel %vm64, %v821, 0
  %824 = vmatprep.subr.mxu0 0.0
  %825 = vmatpush1.msra.mxu0 0.0
  %826 = vmatprep.subr.mxu0 0.0
  %827 = vmatpush1.msra.mxu0 0.0
  %828 = vmatprep.subr.mxu0 0.0
  %829 = vmatpush1.msra.mxu0 0.0
  %830 = vmatprep.subr.mxu0 0.0
  %831 = vmatpush1.msra.mxu0 0.0
  %832 = vmatprep.subr.mxu0 0.0
  %833 = vmatpush1.msra.mxu0 0.0
  %834 = vmatprep.subr.mxu0 0.0
  %835 = vmatpush1.msra.mxu0 0.0
  %836 = vmatprep.subr.mxu0 0.0
  %837 = vmatpush1.msra.mxu0 0.0
  %838 = vmatprep.subr.mxu0 0.0
  %839 = vmatpush1.msra.mxu0 0.0
  %840 = vmatprep.subr.mxu0 0.0
  %841 = vmatpush1.msra.mxu0 0.0
  %842 = vmatprep.subr.mxu0 0.0
  %843 = vmatpush1.msra.mxu0 0.0
  %844 = vmatprep.subr.mxu0 0.0
  %845 = vmatpush1.msra.mxu0 0.0
  %846 = vmatprep.subr.mxu0 0.0
  %847 = vmatpush1.msra.mxu0 0.0
  %848 = vmatprep.subr.mxu0 0.0
  %849 = vmatpush1.msra.mxu0 %v29
  %850 = vmatprep.subr.mxu0 0.0
  %851 = vmatpush1.msra.mxu0 %v28
  %852 = vmatprep.subr.mxu0 0.0
  %853 = vmatpush1.msra.mxu0 %v27
  %854 = vmatprep.subr.mxu0 0.0
  %855 = vmatpush1.msra.mxu0 %v26
  %856 = vmatprep.subr.mxu0 0.0
  %857 = vmatpush2.msra.mxu0 0.0
  %858 = vmatprep.subr.mxu0 0.0
  %859 = vmatpush2.msra.mxu0 0.0
  %860 = vmatprep.subr.mxu0 0.0
  %861 = vmatpush2.msra.mxu0 0.0
  %862 = vmatprep.subr.mxu0 0.0
  %863 = vmatpush2.msra.mxu0 0.0
  %864 = vmatprep.subr.mxu0 0.0
  %865 = vmatpush2.msra.mxu0 0.0
  %866 = vmatprep.subr.mxu0 0.0
  %867 = vmatpush2.msra.mxu0 0.0
  %868 = vmatprep.subr.mxu0 0.0
  %869 = vmatpush2.msra.mxu0 0.0
  %870 = vmatprep.subr.mxu0 0.0
  %871 = vmatpush2.msra.mxu0 0.0
  %872 = vmatprep.subr.mxu0 0.0
  %873 = vmatpush2.msra.mxu0 0.0
  %874 = vmatprep.subr.mxu0 0.0
  %875 = vmatpush2.msra.mxu0 0.0
  %876 = vmatprep.subr.mxu0 0.0
  %877 = vmatpush2.msra.mxu0 0.0
  %878 = vmatprep.subr.mxu0 0.0
  %879 = vmatpush2.msra.mxu0 0.0
  %880 = vmatprep.subr.mxu0 0.0
  %881 = vmatpush2.msra.mxu0 0.0
  %882 = vmatprep.subr.mxu0 0.0
  %883 = vmatpush2.msra.mxu0 0.0
  %884 = vmatprep.subr.mxu0 0.0
  %885 = vmatpush2.msra.mxu0 0.0
  %886 = vmatprep.subr.mxu0 0.0
  %887 = vmatpush2.msra.mxu0 0.0
  %888 = vmatprep.mubr.f32.mxu0 0.0
  %889 = vmatmul.mubr.f32.gmra.mxu0 %v822
  %v890 = vpop.f32.mrf.mxu0
  %v891 = vadd.f32 %v818, %v890
  %v892 = vpop.f32.mrf.mxu0
  %893 = vdwg.mxu0
  %v894 = vxor.u32 %v891, 2147483648
  %v895 = vmul.f32 %v894, 1.442695
  %v896 = vpow.pop %v895
  %v897 = vadd.f32 %v896, 1.0
  %v898 = vrcp.pop %v897
  %v899 = vmul.f32 1.0, %v898
  %v900 = vtanh.pop %v891
  %v901 = vmul.f32 %v899, %v803
  %903 = vrot.lane.b32.xlu0 %v900, 64
  %v904 = vpop.permute.xlu0 %903
  %v906 = vmul.f32 %v899, %v904
  %908 = vrot.lane.b32.xlu0 %v906, 32
  %v909 = vpop.permute.xlu0 %908
  %v911 = vadd.f32 %v901, %v909
  %v912 = vtanh.pop %v911
  %914 = vrot.lane.b32.xlu0 %v912, 64
  %v915 = vpop.permute.xlu0 %914
  %v917 = vmul.f32 %v899, %v915
  %v918 = vlaneseq
  %v919 = vand.u32 %v918, 127
  %920 = vrot.lane.b32.xlu0 %v49, 96
  %v921 = vpop.permute.xlu0 %920
  %v923 = vmul.f32 %v917, %v921
  %925 = vrot.lane.b32.xlu0 %v923, 32
  %v926 = vpop.permute.xlu0 %925
  %v928 = vsel %vm64, %v926, 0.0
  %929 = vadd.xlane.f32.xlu0 %v928
  %v930 = vpop.xlane.xlu0 %929
  %v931 = vadd.f32 %v930, %v43
  %vm932 = vcmp.eq.s32.totalorder %v919, 0
  %934 = vset.pattern.permute.xlu0 0
  %935 = vperm.xlu0 %934, %v931
  %v936 = vpop.permute.xlu0 %935
  %v938 = vsel %vm932, %v936, 0.0
  %v939 = vmul.f32 %v936, %v60
  %v940 = vadd.f32 %v939, %v37
  %942 = vrot.lane.b32.xlu0 %v917, 32
  %v943 = vpop.permute.xlu0 %942
  %v944 = vsel %vm64, %v943, 0
  %946 = vmatprep.subr.mxu0 0.0
  %947 = vmatpush1.msra.mxu0 0.0
  %948 = vmatprep.subr.mxu0 0.0
  %949 = vmatpush1.msra.mxu0 0.0
  %950 = vmatprep.subr.mxu0 0.0
  %951 = vmatpush1.msra.mxu0 0.0
  %952 = vmatprep.subr.mxu0 0.0
  %953 = vmatpush1.msra.mxu0 0.0
  %954 = vmatprep.subr.mxu0 0.0
  %955 = vmatpush1.msra.mxu0 0.0
  %956 = vmatprep.subr.mxu0 0.0
  %957 = vmatpush1.msra.mxu0 0.0
  %958 = vmatprep.subr.mxu0 0.0
  %959 = vmatpush1.msra.mxu0 0.0
  %960 = vmatprep.subr.mxu0 0.0
  %961 = vmatpush1.msra.mxu0 0.0
  %962 = vmatprep.subr.mxu0 0.0
  %963 = vmatpush1.msra.mxu0 0.0
  %964 = vmatprep.subr.mxu0 0.0
  %965 = vmatpush1.msra.mxu0 0.0
  %966 = vmatprep.subr.mxu0 0.0
  %967 = vmatpush1.msra.mxu0 0.0
  %968 = vmatprep.subr.mxu0 0.0
  %969 = vmatpush1.msra.mxu0 0.0
  %970 = vmatprep.subr.mxu0 0.0
  %971 = vmatpush1.msra.mxu0 %v29
  %972 = vmatprep.subr.mxu0 0.0
  %973 = vmatpush1.msra.mxu0 %v28
  %974 = vmatprep.subr.mxu0 0.0
  %975 = vmatpush1.msra.mxu0 %v27
  %976 = vmatprep.subr.mxu0 0.0
  %977 = vmatpush1.msra.mxu0 %v26
  %978 = vmatprep.subr.mxu0 0.0
  %979 = vmatpush2.msra.mxu0 0.0
  %980 = vmatprep.subr.mxu0 0.0
  %981 = vmatpush2.msra.mxu0 0.0
  %982 = vmatprep.subr.mxu0 0.0
  %983 = vmatpush2.msra.mxu0 0.0
  %984 = vmatprep.subr.mxu0 0.0
  %985 = vmatpush2.msra.mxu0 0.0
  %986 = vmatprep.subr.mxu0 0.0
  %987 = vmatpush2.msra.mxu0 0.0
  %988 = vmatprep.subr.mxu0 0.0
  %989 = vmatpush2.msra.mxu0 0.0
  %990 = vmatprep.subr.mxu0 0.0
  %991 = vmatpush2.msra.mxu0 0.0
  %992 = vmatprep.subr.mxu0 0.0
  %993 = vmatpush2.msra.mxu0 0.0
  %994 = vmatprep.subr.mxu0 0.0
  %995 = vmatpush2.msra.mxu0 0.0
  %996 = vmatprep.subr.mxu0 0.0
  %997 = vmatpush2.msra.mxu0 0.0
  %998 = vmatprep.subr.mxu0 0.0
  %999 = vmatpush2.msra.mxu0 0.0
  %1000 = vmatprep.subr.mxu0 0.0
  %1001 = vmatpush2.msra.mxu0 0.0
  %1002 = vmatprep.subr.mxu0 0.0
  %1003 = vmatpush2.msra.mxu0 0.0
  %1004 = vmatprep.subr.mxu0 0.0
  %1005 = vmatpush2.msra.mxu0 0.0
  %1006 = vmatprep.subr.mxu0 0.0
  %1007 = vmatpush2.msra.mxu0 0.0
  %1008 = vmatprep.subr.mxu0 0.0
  %1009 = vmatpush2.msra.mxu0 0.0
  %1010 = vmatprep.mubr.f32.mxu0 0.0
  %1011 = vmatmul.mubr.f32.gmra.mxu0 %v944
  %v1012 = vpop.f32.mrf.mxu0
  %v1013 = vadd.f32 %v940, %v1012
  %v1014 = vpop.f32.mrf.mxu0
  %1015 = vdwg.mxu0
  %v1016 = vxor.u32 %v1013, 2147483648
  %v1017 = vmul.f32 %v1016, 1.442695
  %v1018 = vpow.pop %v1017
  %v1019 = vadd.f32 %v1018, 1.0
  %v1020 = vrcp.pop %v1019
  %v1021 = vmul.f32 1.0, %v1020
  %v1022 = vtanh.pop %v1013
  %v1023 = vmul.f32 %v1021, %v911
  %1025 = vrot.lane.b32.xlu0 %v1022, 64
  %v1026 = vpop.permute.xlu0 %1025
  %v1028 = vmul.f32 %v1021, %v1026
  %1030 = vrot.lane.b32.xlu0 %v1028, 32
  %v1031 = vpop.permute.xlu0 %1030
  %v1033 = vadd.f32 %v1023, %v1031
  %v1034 = vtanh.pop %v1033
  %1036 = vrot.lane.b32.xlu0 %v1034, 64
  %v1037 = vpop.permute.xlu0 %1036
  %v1039 = vmul.f32 %v1021, %v1037
  %v1040 = vmul.f32 %v1039, %v921
  %1042 = vrot.lane.b32.xlu0 %v1040, 32
  %v1043 = vpop.permute.xlu0 %1042
  %v1045 = vsel %vm64, %v1043, 0.0
  %1046 = vadd.xlane.f32.xlu0 %v1045
  %v1047 = vpop.xlane.xlu0 %1046
  %v1048 = vadd.f32 %v1047, %v43
  %vm1049 = vcmp.eq.s32.totalorder %v919, 1
  %1051 = vset.pattern.permute.xlu0 0
  %1052 = vperm.xlu0 %1051, %v1048
  %v1053 = vpop.permute.xlu0 %1052
  %v1055 = vsel %vm1049, %v1053, %v938
  %v1056 = vmul.f32 %v1053, %v60
  %v1057 = vadd.f32 %v1056, %v37
  %1059 = vrot.lane.b32.xlu0 %v1039, 32
  %v1060 = vpop.permute.xlu0 %1059
  %v1061 = vsel %vm64, %v1060, 0
  %1063 = vmatprep.subr.mxu0 0.0
  %1064 = vmatpush1.msra.mxu0 0.0
  %1065 = vmatprep.subr.mxu0 0.0
  %1066 = vmatpush1.msra.mxu0 0.0
  %1067 = vmatprep.subr.mxu0 0.0
  %1068 = vmatpush1.msra.mxu0 0.0
  %1069 = vmatprep.subr.mxu0 0.0
  %1070 = vmatpush1.msra.mxu0 0.0
  %1071 = vmatprep.subr.mxu0 0.0
  %1072 = vmatpush1.msra.mxu0 0.0
  %1073 = vmatprep.subr.mxu0 0.0
  %1074 = vmatpush1.msra.mxu0 0.0
  %1075 = vmatprep.subr.mxu0 0.0
  %1076 = vmatpush1.msra.mxu0 0.0
  %1077 = vmatprep.subr.mxu0 0.0
  %1078 = vmatpush1.msra.mxu0 0.0
  %1079 = vmatprep.subr.mxu0 0.0
  %1080 = vmatpush1.msra.mxu0 0.0
  %1081 = vmatprep.subr.mxu0 0.0
  %1082 = vmatpush1.msra.mxu0 0.0
  %1083 = vmatprep.subr.mxu0 0.0
  %1084 = vmatpush1.msra.mxu0 0.0
  %1085 = vmatprep.subr.mxu0 0.0
  %1086 = vmatpush1.msra.mxu0 0.0
  %1087 = vmatprep.subr.mxu0 0.0
  %1088 = vmatpush1.msra.mxu0 %v29
  %1089 = vmatprep.subr.mxu0 0.0
  %1090 = vmatpush1.msra.mxu0 %v28
  %1091 = vmatprep.subr.mxu0 0.0
  %1092 = vmatpush1.msra.mxu0 %v27
  %1093 = vmatprep.subr.mxu0 0.0
  %1094 = vmatpush1.msra.mxu0 %v26
  %1095 = vmatprep.subr.mxu0 0.0
  %1096 = vmatpush2.msra.mxu0 0.0
  %1097 = vmatprep.subr.mxu0 0.0
  %1098 = vmatpush2.msra.mxu0 0.0
  %1099 = vmatprep.subr.mxu0 0.0
  %1100 = vmatpush2.msra.mxu0 0.0
  %1101 = vmatprep.subr.mxu0 0.0
  %1102 = vmatpush2.msra.mxu0 0.0
  %1103 = vmatprep.subr.mxu0 0.0
  %1104 = vmatpush2.msra.mxu0 0.0
  %1105 = vmatprep.subr.mxu0 0.0
  %1106 = vmatpush2.msra.mxu0 0.0
  %1107 = vmatprep.subr.mxu0 0.0
  %1108 = vmatpush2.msra.mxu0 0.0
  %1109 = vmatprep.subr.mxu0 0.0
  %1110 = vmatpush2.msra.mxu0 0.0
  %1111 = vmatprep.subr.mxu0 0.0
  %1112 = vmatpush2.msra.mxu0 0.0
  %1113 = vmatprep.subr.mxu0 0.0
  %1114 = vmatpush2.msra.mxu0 0.0
  %1115 = vmatprep.subr.mxu0 0.0
  %1116 = vmatpush2.msra.mxu0 0.0
  %1117 = vmatprep.subr.mxu0 0.0
  %1118 = vmatpush2.msra.mxu0 0.0
  %1119 = vmatprep.subr.mxu0 0.0
  %1120 = vmatpush2.msra.mxu0 0.0
  %1121 = vmatprep.subr.mxu0 0.0
  %1122 = vmatpush2.msra.mxu0 0.0
  %1123 = vmatprep.subr.mxu0 0.0
  %1124 = vmatpush2.msra.mxu0 0.0
  %1125 = vmatprep.subr.mxu0 0.0
  %1126 = vmatpush2.msra.mxu0 0.0
  %1127 = vmatprep.mubr.f32.mxu0 0.0
  %1128 = vmatmul.mubr.f32.gmra.mxu0 %v1061
  %v1129 = vpop.f32.mrf.mxu0
  %v1130 = vadd.f32 %v1057, %v1129
  %v1131 = vpop.f32.mrf.mxu0
  %1132 = vdwg.mxu0
  %v1133 = vxor.u32 %v1130, 2147483648
  %v1134 = vmul.f32 %v1133, 1.442695
  %v1135 = vpow.pop %v1134
  %v1136 = vadd.f32 %v1135, 1.0
  %v1137 = vrcp.pop %v1136
  %v1138 = vmul.f32 1.0, %v1137
  %v1139 = vtanh.pop %v1130
  %v1140 = vmul.f32 %v1138, %v1033
  %1142 = vrot.lane.b32.xlu0 %v1139, 64
  %v1143 = vpop.permute.xlu0 %1142
  %v1145 = vmul.f32 %v1138, %v1143
  %1147 = vrot.lane.b32.xlu0 %v1145, 32
  %v1148 = vpop.permute.xlu0 %1147
  %v1150 = vadd.f32 %v1140, %v1148
  %v1151 = vtanh.pop %v1150
  %1153 = vrot.lane.b32.xlu0 %v1151, 64
  %v1154 = vpop.permute.xlu0 %1153
  %v1156 = vmul.f32 %v1138, %v1154
  %v1157 = vmul.f32 %v1156, %v921
  %1159 = vrot.lane.b32.xlu0 %v1157, 32
  %v1160 = vpop.permute.xlu0 %1159
  %v1162 = vsel %vm64, %v1160, 0.0
  %1163 = vadd.xlane.f32.xlu0 %v1162
  %v1164 = vpop.xlane.xlu0 %1163
  %v1165 = vadd.f32 %v1164, %v43
  %vm1166 = vcmp.eq.s32.totalorder %v919, 2
  %1168 = vset.pattern.permute.xlu0 0
  %1169 = vperm.xlu0 %1168, %v1165
  %v1170 = vpop.permute.xlu0 %1169
  %v1172 = vsel %vm1166, %v1170, %v1055
  %v1173 = vmul.f32 %v1170, %v60
  %v1174 = vadd.f32 %v1173, %v37
  %1176 = vrot.lane.b32.xlu0 %v1156, 32
  %v1177 = vpop.permute.xlu0 %1176
  %v1178 = vsel %vm64, %v1177, 0
  %1180 = vmatprep.subr.mxu0 0.0
  %1181 = vmatpush1.msra.mxu0 0.0
  %1182 = vmatprep.subr.mxu0 0.0
  %1183 = vmatpush1.msra.mxu0 0.0
  %1184 = vmatprep.subr.mxu0 0.0
  %1185 = vmatpush1.msra.mxu0 0.0
  %1186 = vmatprep.subr.mxu0 0.0
  %1187 = vmatpush1.msra.mxu0 0.0
  %1188 = vmatprep.subr.mxu0 0.0
  %1189 = vmatpush1.msra.mxu0 0.0
  %1190 = vmatprep.subr.mxu0 0.0
  %1191 = vmatpush1.msra.mxu0 0.0
  %1192 = vmatprep.subr.mxu0 0.0
  %1193 = vmatpush1.msra.mxu0 0.0
  %1194 = vmatprep.subr.mxu0 0.0
  %1195 = vmatpush1.msra.mxu0 0.0
  %1196 = vmatprep.subr.mxu0 0.0
  %1197 = vmatpush1.msra.mxu0 0.0
  %1198 = vmatprep.subr.mxu0 0.0
  %1199 = vmatpush1.msra.mxu0 0.0
  %1200 = vmatprep.subr.mxu0 0.0
  %1201 = vmatpush1.msra.mxu0 0.0
  %1202 = vmatprep.subr.mxu0 0.0
  %1203 = vmatpush1.msra.mxu0 0.0
  %1204 = vmatprep.subr.mxu0 0.0
  %1205 = vmatpush1.msra.mxu0 %v29
  %1206 = vmatprep.subr.mxu0 0.0
  %1207 = vmatpush1.msra.mxu0 %v28
  %1208 = vmatprep.subr.mxu0 0.0
  %1209 = vmatpush1.msra.mxu0 %v27
  %1210 = vmatprep.subr.mxu0 0.0
  %1211 = vmatpush1.msra.mxu0 %v26
  %1212 = vmatprep.subr.mxu0 0.0
  %1213 = vmatpush2.msra.mxu0 0.0
  %1214 = vmatprep.subr.mxu0 0.0
  %1215 = vmatpush2.msra.mxu0 0.0
  %1216 = vmatprep.subr.mxu0 0.0
  %1217 = vmatpush2.msra.mxu0 0.0
  %1218 = vmatprep.subr.mxu0 0.0
  %1219 = vmatpush2.msra.mxu0 0.0
  %1220 = vmatprep.subr.mxu0 0.0
  %1221 = vmatpush2.msra.mxu0 0.0
  %1222 = vmatprep.subr.mxu0 0.0
  %1223 = vmatpush2.msra.mxu0 0.0
  %1224 = vmatprep.subr.mxu0 0.0
  %1225 = vmatpush2.msra.mxu0 0.0
  %1226 = vmatprep.subr.mxu0 0.0
  %1227 = vmatpush2.msra.mxu0 0.0
  %1228 = vmatprep.subr.mxu0 0.0
  %1229 = vmatpush2.msra.mxu0 0.0
  %1230 = vmatprep.subr.mxu0 0.0
  %1231 = vmatpush2.msra.mxu0 0.0
  %1232 = vmatprep.subr.mxu0 0.0
  %1233 = vmatpush2.msra.mxu0 0.0
  %1234 = vmatprep.subr.mxu0 0.0
  %1235 = vmatpush2.msra.mxu0 0.0
  %1236 = vmatprep.subr.mxu0 0.0
  %1237 = vmatpush2.msra.mxu0 0.0
  %1238 = vmatprep.subr.mxu0 0.0
  %1239 = vmatpush2.msra.mxu0 0.0
  %1240 = vmatprep.subr.mxu0 0.0
  %1241 = vmatpush2.msra.mxu0 0.0
  %1242 = vmatprep.subr.mxu0 0.0
  %1243 = vmatpush2.msra.mxu0 0.0
  %1244 = vmatprep.mubr.f32.mxu0 0.0
  %1245 = vmatmul.mubr.f32.gmra.mxu0 %v1178
  %v1246 = vpop.f32.mrf.mxu0
  %v1247 = vadd.f32 %v1174, %v1246
  %v1248 = vpop.f32.mrf.mxu0
  %1249 = vdwg.mxu0
  %v1250 = vxor.u32 %v1247, 2147483648
  %v1251 = vmul.f32 %v1250, 1.442695
  %v1252 = vpow.pop %v1251
  %v1253 = vadd.f32 %v1252, 1.0
  %v1254 = vrcp.pop %v1253
  %v1255 = vmul.f32 1.0, %v1254
  %v1256 = vtanh.pop %v1247
  %v1257 = vmul.f32 %v1255, %v1150
  %1259 = vrot.lane.b32.xlu0 %v1256, 64
  %v1260 = vpop.permute.xlu0 %1259
  %v1262 = vmul.f32 %v1255, %v1260
  %1264 = vrot.lane.b32.xlu0 %v1262, 32
  %v1265 = vpop.permute.xlu0 %1264
  %v1267 = vadd.f32 %v1257, %v1265
  %v1268 = vtanh.pop %v1267
  %1270 = vrot.lane.b32.xlu0 %v1268, 64
  %v1271 = vpop.permute.xlu0 %1270
  %v1273 = vmul.f32 %v1255, %v1271
  %v1274 = vmul.f32 %v1273, %v921
  %1276 = vrot.lane.b32.xlu0 %v1274, 32
  %v1277 = vpop.permute.xlu0 %1276
  %v1279 = vsel %vm64, %v1277, 0.0
  %1280 = vadd.xlane.f32.xlu0 %v1279
  %v1281 = vpop.xlane.xlu0 %1280
  %v1282 = vadd.f32 %v1281, %v43
  %vm1283 = vcmp.eq.s32.totalorder %v919, 3
  %1285 = vset.pattern.permute.xlu0 0
  %1286 = vperm.xlu0 %1285, %v1282
  %v1287 = vpop.permute.xlu0 %1286
  %v1289 = vsel %vm1283, %v1287, %v1172
  %v1290 = vmul.f32 %v1287, %v60
  %v1291 = vadd.f32 %v1290, %v37
  %1293 = vrot.lane.b32.xlu0 %v1273, 32
  %v1294 = vpop.permute.xlu0 %1293
  %v1295 = vsel %vm64, %v1294, 0
  %1297 = vmatprep.subr.mxu0 0.0
  %1298 = vmatpush1.msra.mxu0 0.0
  %1299 = vmatprep.subr.mxu0 0.0
  %1300 = vmatpush1.msra.mxu0 0.0
  %1301 = vmatprep.subr.mxu0 0.0
  %1302 = vmatpush1.msra.mxu0 0.0
  %1303 = vmatprep.subr.mxu0 0.0
  %1304 = vmatpush1.msra.mxu0 0.0
  %1305 = vmatprep.subr.mxu0 0.0
  %1306 = vmatpush1.msra.mxu0 0.0
  %1307 = vmatprep.subr.mxu0 0.0
  %1308 = vmatpush1.msra.mxu0 0.0
  %1309 = vmatprep.subr.mxu0 0.0
  %1310 = vmatpush1.msra.mxu0 0.0
  %1311 = vmatprep.subr.mxu0 0.0
  %1312 = vmatpush1.msra.mxu0 0.0
  %1313 = vmatprep.subr.mxu0 0.0
  %1314 = vmatpush1.msra.mxu0 0.0
  %1315 = vmatprep.subr.mxu0 0.0
  %1316 = vmatpush1.msra.mxu0 0.0
  %1317 = vmatprep.subr.mxu0 0.0
  %1318 = vmatpush1.msra.mxu0 0.0
  %1319 = vmatprep.subr.mxu0 0.0
  %1320 = vmatpush1.msra.mxu0 0.0
  %1321 = vmatprep.subr.mxu0 0.0
  %1322 = vmatpush1.msra.mxu0 %v29
  %1323 = vmatprep.subr.mxu0 0.0
  %1324 = vmatpush1.msra.mxu0 %v28
  %1325 = vmatprep.subr.mxu0 0.0
  %1326 = vmatpush1.msra.mxu0 %v27
  %1327 = vmatprep.subr.mxu0 0.0
  %1328 = vmatpush1.msra.mxu0 %v26
  %1329 = vmatprep.subr.mxu0 0.0
  %1330 = vmatpush2.msra.mxu0 0.0
  %1331 = vmatprep.subr.mxu0 0.0
  %1332 = vmatpush2.msra.mxu0 0.0
  %1333 = vmatprep.subr.mxu0 0.0
  %1334 = vmatpush2.msra.mxu0 0.0
  %1335 = vmatprep.subr.mxu0 0.0
  %1336 = vmatpush2.msra.mxu0 0.0
  %1337 = vmatprep.subr.mxu0 0.0
  %1338 = vmatpush2.msra.mxu0 0.0
  %1339 = vmatprep.subr.mxu0 0.0
  %1340 = vmatpush2.msra.mxu0 0.0
  %1341 = vmatprep.subr.mxu0 0.0
  %1342 = vmatpush2.msra.mxu0 0.0
  %1343 = vmatprep.subr.mxu0 0.0
  %1344 = vmatpush2.msra.mxu0 0.0
  %1345 = vmatprep.subr.mxu0 0.0
  %1346 = vmatpush2.msra.mxu0 0.0
  %1347 = vmatprep.subr.mxu0 0.0
  %1348 = vmatpush2.msra.mxu0 0.0
  %1349 = vmatprep.subr.mxu0 0.0
  %1350 = vmatpush2.msra.mxu0 0.0
  %1351 = vmatprep.subr.mxu0 0.0
  %1352 = vmatpush2.msra.mxu0 0.0
  %1353 = vmatprep.subr.mxu0 0.0
  %1354 = vmatpush2.msra.mxu0 0.0
  %1355 = vmatprep.subr.mxu0 0.0
  %1356 = vmatpush2.msra.mxu0 0.0
  %1357 = vmatprep.subr.mxu0 0.0
  %1358 = vmatpush2.msra.mxu0 0.0
  %1359 = vmatprep.subr.mxu0 0.0
  %1360 = vmatpush2.msra.mxu0 0.0
  %1361 = vmatprep.mubr.f32.mxu0 0.0
  %1362 = vmatmul.mubr.f32.gmra.mxu0 %v1295
  %v1363 = vpop.f32.mrf.mxu0
  %v1364 = vadd.f32 %v1291, %v1363
  %v1365 = vpop.f32.mrf.mxu0
  %1366 = vdwg.mxu0
  %v1367 = vxor.u32 %v1364, 2147483648
  %v1368 = vmul.f32 %v1367, 1.442695
  %v1369 = vpow.pop %v1368
  %v1370 = vadd.f32 %v1369, 1.0
  %v1371 = vrcp.pop %v1370
  %v1372 = vmul.f32 1.0, %v1371
  %v1373 = vtanh.pop %v1364
  %v1374 = vmul.f32 %v1372, %v1267
  %1376 = vrot.lane.b32.xlu0 %v1373, 64
  %v1377 = vpop.permute.xlu0 %1376
  %v1379 = vmul.f32 %v1372, %v1377
  %1381 = vrot.lane.b32.xlu0 %v1379, 32
  %v1382 = vpop.permute.xlu0 %1381
  %v1384 = vadd.f32 %v1374, %v1382
  %v1385 = vtanh.pop %v1384
  %1387 = vrot.lane.b32.xlu0 %v1385, 64
  %v1388 = vpop.permute.xlu0 %1387
  %v1390 = vmul.f32 %v1372, %v1388
  %v1391 = vmul.f32 %v1390, %v921
  %1393 = vrot.lane.b32.xlu0 %v1391, 32
  %v1394 = vpop.permute.xlu0 %1393
  %v1396 = vsel %vm64, %v1394, 0.0
  %1397 = vadd.xlane.f32.xlu0 %v1396
  %v1398 = vpop.xlane.xlu0 %1397
  %v1399 = vadd.f32 %v1398, %v43
  %vm1400 = vcmp.eq.s32.totalorder %v919, 4
  %1402 = vset.pattern.permute.xlu0 0
  %1403 = vperm.xlu0 %1402, %v1399
  %v1404 = vpop.permute.xlu0 %1403
  %v1406 = vsel %vm1400, %v1404, %v1289
  %vm1407 = vcmask 39936
  %1408 = vst.msk [vmem:[%s6] sm:$0xff] %vm1407, %v1406
  // Predicated region
  $region26: #{encoder_forward.1} parent=0 // pred_check
    _
  $region27: #{encoder_forward.1} parent=0 // pred_check_branch
    %1410 = sbr.rel (0) target = $region29
  $region28: #{encoder_forward.1} parent=0 // pred_region
    _
  $region29: #{encoder_forward.1} parent=0 // pred_fallthru
    _
  // Predicated region
  $region30: #{encoder_forward.1} parent=0 // pred_check
    _
  $region31: #{encoder_forward.1} parent=0 // pred_check_branch
    %1412 = sbr.rel (0) target = $region33
  $region32: #{encoder_forward.1} parent=0 // pred_region
    _
  $region33: #{encoder_forward.1} parent=0 // pred_fallthru
    _

</llo_original>
